<compile_context>
chip_gen: v7x
topology: tpu7x:2x2x1
jax: 0.10.0
libtpu: 0.0.40
codegen_flags: <defaults>
</compile_context>

<pallas_src>
import math
from functools import partial

import jax
import jax.numpy as jnp
from jax import lax
from jax.experimental import pallas as pl
from jax.experimental.pallas import tpu as pltpu

IN_DIM = 1200
HID_DIM = 512
OUT_DIM = 2
OUT_ROWS = 8      # output rows padded 2 -> 8 (sublane alignment); sliced back in wrapper

# Batch tiles are independent. Plain "parallel" vs "arbitrary" barely changes codegen on
# single-TensorCore chips (v5e/v6e). On v7x, switch this to (pltpu.CORE_PARALLEL,) to
# actually split batch tiles across its 2 TensorCores (each core then holds its own
# resident copy of w1/w2t in VMEM -- still tiny).
_BATCH_DIM_SEMANTICS = ("parallel",)


def _round_up(n, m):
    return ((n + m - 1) // m) * m


def _pick_batch_tile(B, block_b):
    """Balanced batch tiling. Single tile for B <= block_b (rounded to 8 sublanes);
    otherwise tiles rounded to 128 so the transposed output stays lane-dense/unmasked
    and padding never ~doubles the work."""
    n_tiles = -(-B // block_b)
    if n_tiles == 1:
        tb = _round_up(B, 8)
    else:
        tb = _round_up(-(-B // n_tiles), 128)
    b_pad = _round_up(B, tb)
    return tb, b_pad


def actor_kernel(x_ref, w1_ref, b1_ref, w2t_ref, b2_ref, o_ref):
    # x arrives as f32 from HBM (4 B/elem, no extra pad/cast pass); cast to bf16 on the VPU.
    x = x_ref[...].astype(jnp.bfloat16)                               # (tb, 1200)
    # fc1: bf16 MXU matmul, f32 accumulation; bias + ReLU epilogue in f32.
    h = jnp.dot(x, w1_ref[...], preferred_element_type=jnp.float32)   # (tb, 512) f32
    h = jnp.maximum(h + b1_ref[...], 0.0)
    # fc2, computed transposed so the output slab is (8, tb) with batch on lanes:
    #   out_t[o, b] = sum_k w2t[o, k] * h[b, k]
    out_t = lax.dot_general(
        w2t_ref[...], h.astype(jnp.bfloat16),
        (((1,), (1,)), ((), ())),
        preferred_element_type=jnp.float32)                           # (8, tb) f32
    o_ref[...] = out_t + b2_ref[...]                                  # b2: (8, 1) broadcast


def prepare_actor_params(w1, b1, w2, b2):
    """Cast/pad weights ONCE (hoisted out of the per-call path).
    w1: (1200, 512), b1: (512,), w2: (512, 2), b2: (2,) -- all stored [in, out]."""
    w1_p = w1.astype(jnp.bfloat16)                                    # (1200, 512) bf16
    b1_p = b1.reshape(1, HID_DIM).astype(jnp.float32)                 # (1, 512)    f32
    w2t_p = jnp.zeros((OUT_ROWS, HID_DIM), jnp.bfloat16).at[:OUT_DIM, :].set(
        w2.T.astype(jnp.bfloat16))                                    # (8, 512)    bf16
    b2_p = jnp.zeros((OUT_ROWS, 1), jnp.float32).at[:OUT_DIM, 0].set(
        b2.astype(jnp.float32))                                       # (8, 1)      f32
    return w1_p, b1_p, w2t_p, b2_p


@partial(jax.jit, static_argnames=("block_b",))
def actor_forward(x, params, block_b=512):
    """x: (B, 1200) f32; params: output of prepare_actor_params. Returns (B, 2) f32."""
    w1_p, b1_p, w2t_p, b2_p = params
    B = x.shape[0]
    tb, b_pad = _pick_batch_tile(B, block_b)

    if b_pad != B:   # only the (cheap) batch dim is ever padded; features stay 1200.
        x = jnp.pad(x, ((0, b_pad - B), (0, 0)))

    out_t = pl.pallas_call(
        actor_kernel,
        out_shape=jax.ShapeDtypeStruct((OUT_ROWS, b_pad), jnp.float32),
        grid=(b_pad // tb,),
        in_specs=[
            pl.BlockSpec((tb, IN_DIM), lambda i: (i, 0)),          # x: tiled over batch
            pl.BlockSpec((IN_DIM, HID_DIM), lambda i: (0, 0)),     # w1: resident
            pl.BlockSpec((1, HID_DIM), lambda i: (0, 0)),          # b1: resident
            pl.BlockSpec((OUT_ROWS, HID_DIM), lambda i: (0, 0)),   # w2^T: resident
            pl.BlockSpec((OUT_ROWS, 1), lambda i: (0, 0)),         # b2: resident
        ],
        out_specs=pl.BlockSpec((OUT_ROWS, tb), lambda i: (0, i)),  # (8, tb) lane-dense slab
        compiler_params=pltpu.CompilerParams(
            dimension_semantics=_BATCH_DIM_SEMANTICS,
        ),
    )(x, w1_p, b1_p, w2t_p, b2_p)

    # Un-transpose and drop padding: (8, b_pad) -> (B, 2). Fuses inside the jit.
    return out_t[:OUT_DIM, :B].T


def init_params(key):
    """Deterministic init mimicking nn.Linear default (uniform +-1/sqrt(fan_in)).
    Weights stored as [in, out] so the math is x @ W + b (== PyTorch x @ W.T)."""
    k1, k2, k3, k4 = jax.random.split(key, 4)
    bound1 = 1.0 / math.sqrt(IN_DIM)
    bound2 = 1.0 / math.sqrt(HID_DIM)
    w1 = jax.random.uniform(k1, (IN_DIM, HID_DIM), jnp.float32, -bound1, bound1)
    b1 = jax.random.uniform(k2, (HID_DIM,), jnp.float32, -bound1, bound1)
    w2 = jax.random.uniform(k3, (HID_DIM, OUT_DIM), jnp.float32, -bound2, bound2)
    b2 = jax.random.uniform(k4, (OUT_DIM,), jnp.float32, -bound2, bound2)
    return w1, b1, w2, b2


if __name__ == "__main__":
    key = jax.random.PRNGKey(0)
    kx, kp = jax.random.split(key)
    batch = 2
    x = jax.random.normal(kx, (batch, IN_DIM), jnp.float32)
    w1, b1, w2, b2 = init_params(kp)

    params = prepare_actor_params(w1, b1, w2, b2)   # one-time weight prep (cached/reused)
    out = jax.block_until_ready(actor_forward(x, params))

    # Reference mirroring the kernel's deliberate numerics: bf16 matmul inputs,
    # f32 accumulation, f32 bias/ReLU epilogue.
    xb, w1b, w2b = (a.astype(jnp.bfloat16) for a in (x, w1, w2))
    h_ref = jnp.maximum(jnp.dot(xb, w1b, preferred_element_type=jnp.float32) + b1, 0.0)
    ref = jnp.dot(h_ref.astype(jnp.bfloat16), w2b,
                  preferred_element_type=jnp.float32) + b2

    assert out.shape == (batch, OUT_DIM), out.shape
    assert jnp.allclose(out, ref, atol=1e-2, rtol=1e-2), (out, ref)

    print("KERNEL_OK")
</pallas_src>

<mosaic_0001>
module attributes {stable_mosaic.version = 11 : i64} {
  func.func @actor_kernel(%arg0: i32, %arg1: memref<8x1200xf32, #tpu.memory_space<vmem>>, %arg2: memref<1200x512xbf16, #tpu.memory_space<vmem>>, %arg3: memref<1x512xf32, #tpu.memory_space<vmem>>, %arg4: memref<8x512xbf16, #tpu.memory_space<vmem>>, %arg5: memref<8x1xf32, #tpu.memory_space<vmem>>, %arg6: memref<8x8xf32, #tpu.memory_space<vmem>>) attributes {dimension_semantics = [#tpu.dimension_semantics<parallel>], iteration_bounds = array<i64: 1>, scalar_prefetch = 0 : i64, scratch_operands = 0 : i64, tpu.core_type = #tpu.core_type<tc>, window_params = [{transform_indices = @transform_0, window_bounds = array<i64: 8, 1200>}, {pipeline_mode = #tpu.pipeline_mode<synchronous>, transform_indices = @transform_1, window_bounds = array<i64: 1200, 512>}, {pipeline_mode = #tpu.pipeline_mode<synchronous>, transform_indices = @transform_2, window_bounds = array<i64: 1, 512>}, {pipeline_mode = #tpu.pipeline_mode<synchronous>, transform_indices = @transform_3, window_bounds = array<i64: 8, 512>}, {pipeline_mode = #tpu.pipeline_mode<synchronous>, transform_indices = @transform_4, window_bounds = array<i64: 8, 1>}, {transform_indices = @transform_5, window_bounds = array<i64: 8, 8>}]} {
    %c0 = arith.constant 0 : index
    %c0_0 = arith.constant 0 : index
    %0 = vector.load %arg1[%c0, %c0_0] : memref<8x1200xf32, #tpu.memory_space<vmem>>, vector<8x1200xf32>
    %1 = arith.truncf %0 : vector<8x1200xf32> to vector<8x1200xbf16>
    %c0_1 = arith.constant 0 : index
    %c0_2 = arith.constant 0 : index
    %2 = vector.load %arg2[%c0_1, %c0_2] : memref<1200x512xbf16, #tpu.memory_space<vmem>>, vector<1200x512xbf16>
    %cst = arith.constant dense<0.000000e+00> : vector<8x512xf32>
    %3 = tpu.matmul %1, %2, %cst {dimension_numbers = #tpu.dot_dimension_numbers<[1], [0], [0], [1], [0, 0, 1, 1], [], []>} : vector<8x1200xbf16>, vector<1200x512xbf16>, vector<8x512xf32> -> vector<8x512xf32>
    %c0_3 = arith.constant 0 : index
    %c0_4 = arith.constant 0 : index
    %4 = vector.load %arg3[%c0_3, %c0_4] : memref<1x512xf32, #tpu.memory_space<vmem>>, vector<1x512xf32>
    %5 = vector.broadcast %4 : vector<1x512xf32> to vector<8x512xf32>
    %6 = arith.addf %3, %5 : vector<8x512xf32>
    %cst_5 = arith.constant 0.000000e+00 : f32
    %7 = vector.broadcast %cst_5 : f32 to vector<8x512xf32>
    %8 = arith.maximumf %6, %7 : vector<8x512xf32>
    %c0_6 = arith.constant 0 : index
    %c0_7 = arith.constant 0 : index
    %9 = vector.load %arg4[%c0_6, %c0_7] : memref<8x512xbf16, #tpu.memory_space<vmem>>, vector<8x512xbf16>
    %10 = arith.truncf %8 : vector<8x512xf32> to vector<8x512xbf16>
    %cst_8 = arith.constant dense<0.000000e+00> : vector<8x8xf32>
    %11 = tpu.matmul %9, %10, %cst_8 {dimension_numbers = #tpu.dot_dimension_numbers<[1], [1], [0], [0], [0, 0, 1, 0], [], []>} : vector<8x512xbf16>, vector<8x512xbf16>, vector<8x8xf32> -> vector<8x8xf32>
    %c0_9 = arith.constant 0 : index
    %c0_10 = arith.constant 0 : index
    %12 = vector.load %arg5[%c0_9, %c0_10] : memref<8x1xf32, #tpu.memory_space<vmem>>, vector<8x1xf32>
    %13 = vector.broadcast %12 : vector<8x1xf32> to vector<8x8xf32>
    %14 = arith.addf %11, %13 : vector<8x8xf32>
    %c0_11 = arith.constant 0 : index
    %c0_12 = arith.constant 0 : index
    %15 = vector.load %arg6[%c0_11, %c0_12] : memref<8x8xf32, #tpu.memory_space<vmem>>, vector<8x8xf32>
    tpu.vector_store %arg6[%c0_11, %c0_12], %14 {strides = array<i32>} : memref<8x8xf32, #tpu.memory_space<vmem>>, vector<8x8xf32>,
    return
  }
  func.func @transform_0(%arg0: i32) -> (i32, i32) {
    %c0_i32 = arith.constant 0 : i32
    %c0_i32_0 = arith.constant 0 : i32
    return %arg0, %c0_i32 : i32, i32
  }
  func.func @transform_1(%arg0: i32) -> (i32, i32) {
    %c0_i32 = arith.constant 0 : i32
    %c0_i32_0 = arith.constant 0 : i32
    %c0_i32_1 = arith.constant 0 : i32
    return %c0_i32, %c0_i32_0 : i32, i32
  }
  func.func @transform_2(%arg0: i32) -> (i32, i32) {
    %c0_i32 = arith.constant 0 : i32
    %c0_i32_0 = arith.constant 0 : i32
    %c0_i32_1 = arith.constant 0 : i32
    return %c0_i32, %c0_i32_0 : i32, i32
  }
  func.func @transform_3(%arg0: i32) -> (i32, i32) {
    %c0_i32 = arith.constant 0 : i32
    %c0_i32_0 = arith.constant 0 : i32
    %c0_i32_1 = arith.constant 0 : i32
    return %c0_i32, %c0_i32_0 : i32, i32
  }
  func.func @transform_4(%arg0: i32) -> (i32, i32) {
    %c0_i32 = arith.constant 0 : i32
    %c0_i32_0 = arith.constant 0 : i32
    %c0_i32_1 = arith.constant 0 : i32
    return %c0_i32, %c0_i32_0 : i32, i32
  }
  func.func @transform_5(%arg0: i32) -> (i32, i32) {
    %c0_i32 = arith.constant 0 : i32
    %c0_i32_0 = arith.constant 0 : i32
    return %c0_i32, %arg0 : i32, i32
  }
}

</mosaic_0001>

<llo_original>
// kernel: actor_forward.1
$region0: #{actor_forward.1}
  #allocation0 [shape = 'u32[]', space=smem, size = 0x4, offset = 0x4, fixed_abs, tag = 'smem constant byte address 0x4 - core index']
  #allocation1 [shape = 'u32[144,128]{1,0:T(1,128)}', space=vmem, size = 0x12000, scoped, tag = 'internal scratch']
  %s0 = inlined_call_operand.vmem [shape: f32[8,1200], index: 0, kind: input, shape index: {}]
  %s1 = inlined_call_operand.hbm [shape: bf16[1200,512], index: 1, kind: input, shape index: {}]
  %s2 = inlined_call_operand.hbm [shape: f32[1,512], index: 2, kind: input, shape index: {}]
  %s3 = inlined_call_operand.hbm [shape: bf16[8,512], index: 3, kind: input, shape index: {}]
  %s4 = inlined_call_operand.vmem [shape: f32[8,1], index: 4, kind: input, shape index: {}]
  %s5 = inlined_call_operand.vmem [shape: f32[8,8], index: 5, kind: output, shape index: {}]
  %s6 = sld [smem:[#allocation0]]
  $region42: #{actor_forward.1} parent=0
    _
  %s8 = ssub.s32 1, %s6
  %s9 = scalar_select 0, %s8, %s6
  $region1: #{actor_forward.1} parent=0
    #allocation2 [shape = 'u8[1228800]{0}', space=vmem, size = 0x12c000, scoped, tag = 'input window, operand 1, single buffered']
    #allocation3 [shape = 's32[1]{0}', space=sflag, size = 0x4, scoped, tag = 'scoped memory for actor_forward.1']
    #allocation4 [shape = 'u8[2048]{0}', space=vmem, size = 0x800, scoped, tag = 'input window, operand 2, single buffered']
    #allocation5 [shape = 's32[1]{0}', space=sflag, size = 0x4, scoped, tag = 'scoped memory for actor_forward.1']
    #allocation6 [shape = 'u8[8192]{0}', space=vmem, size = 0x2000, scoped, tag = 'input window, operand 3, single buffered']
    %10 = vsyncpa [#allocation3], 0
    %11 = vsyncpa [#allocation5], 0
    // Predicated region
    $region2: #{actor_forward.1} parent=1 // pred_check
      _
    $region3: #{actor_forward.1} parent=1 // pred_check_branch
      %13 = sbr.rel (0) target = $region5
    $region4: #{actor_forward.1} parent=1 // pred_region
      _
    $region5: #{actor_forward.1} parent=1 // pred_fallthru
      _
    // Predicated region
    $region6: #{actor_forward.1} parent=1 // pred_check
      _
    $region7: #{actor_forward.1} parent=1 // pred_check_branch
      %15 = sbr.rel (0) target = $region9
    $region8: #{actor_forward.1} parent=1 // pred_region
      %s17 = ssub.s32 38400, 38400
      %18 = vsyncadd [#allocation3], %s17
      %s19 = sshll.u32 [#allocation2], 4
      %s20 = int_to_ptr.vmem [resolvable:$true] %s19
      %25 = dma.hbm_to_vmem [thread:$0]  %s1, 38400, %s20, [#allocation3], 256, 256, 16
    $region9: #{actor_forward.1} parent=1 // pred_fallthru
      _
    // Predicated region
    $region10: #{actor_forward.1} parent=1 // pred_check
      _
    $region11: #{actor_forward.1} parent=1 // pred_check_branch
      %27 = sbr.rel (0) target = $region13
    $region12: #{actor_forward.1} parent=1 // pred_region
      %s29 = ssub.s32 64, 64
      %30 = vsyncadd [#allocation5], %s29
      %s32 = sshll.u32 [#allocation4], 4
      %s33 = int_to_ptr.vmem [resolvable:$true] %s32
      %35 = dma.hbm_to_vmem [thread:$0]  %s2, 64, %s33, [#allocation5]
    $region13: #{actor_forward.1} parent=1 // pred_fallthru
      _
    // Predicated region
    $region14: #{actor_forward.1} parent=1 // pred_check
      _
    $region15: #{actor_forward.1} parent=1 // pred_check_branch
      %37 = sbr.rel (0) target = $region17
    $region16: #{actor_forward.1} parent=1 // pred_region
      %s39 = ssub.s32 256, 256
      %40 = vsyncadd [#allocation5], %s39
      %s42 = sshll.u32 [#allocation6], 4
      %s43 = int_to_ptr.vmem [resolvable:$true] %s42
      %45 = dma.hbm_to_vmem [thread:$0]  %s3, 256, %s43, [#allocation5]
    $region17: #{actor_forward.1} parent=1 // pred_fallthru
      _
    // Predicated region
    $region18: #{actor_forward.1} parent=1 // pred_check
      _
    $region19: #{actor_forward.1} parent=1 // pred_check_branch
      %47 = sbr.rel (0) target = $region21
    $region20: #{actor_forward.1} parent=1 // pred_region
      _
    $region21: #{actor_forward.1} parent=1 // pred_fallthru
      _
    // Predicated region
    $region22: #{actor_forward.1} parent=1 // pred_check
      _
    $region23: #{actor_forward.1} parent=1 // pred_check_branch
      %49 = sbr.rel (0) target = $region25
    $region24: #{actor_forward.1} parent=1 // pred_region
      %50 = dma.done [#allocation3], 38400
    $region25: #{actor_forward.1} parent=1 // pred_fallthru
      _
    // Predicated region
    $region26: #{actor_forward.1} parent=1 // pred_check
      _
    $region27: #{actor_forward.1} parent=1 // pred_check_branch
      %52 = sbr.rel (0) target = $region29
    $region28: #{actor_forward.1} parent=1 // pred_region
      %53 = dma.done [#allocation5], 64
    $region29: #{actor_forward.1} parent=1 // pred_fallthru
      _
    // Predicated region
    $region30: #{actor_forward.1} parent=1 // pred_check
      _
    $region31: #{actor_forward.1} parent=1 // pred_check_branch
      %55 = sbr.rel (0) target = $region33
    $region32: #{actor_forward.1} parent=1 // pred_region
      %56 = dma.done [#allocation5], 256
    $region33: #{actor_forward.1} parent=1 // pred_fallthru
      _
    %v58 = vld [vmem:[%s0] sm:$0xff]
    %v59 = vld [vmem:[%s0 + $0x8] sm:$0xff]
    %v60 = vld [vmem:[%s0 + $0x10] sm:$0xff]
    %v61 = vld [vmem:[%s0 + $0x18] sm:$0xff]
    %v62 = vld [vmem:[%s0 + $0x20] sm:$0xff]
    %v63 = vld [vmem:[%s0 + $0x28] sm:$0xff]
    %v64 = vld [vmem:[%s0 + $0x30] sm:$0xff]
    %v65 = vld [vmem:[%s0 + $0x38] sm:$0xff]
    %v66 = vld [vmem:[%s0 + $0x40] sm:$0xff]
    %v67 = vld [vmem:[%s0 + $0x48] sm:$0xff]
    %v68 = vpack.c.bf16 %v58, %v58
    %v69 = vpack.c.bf16 %v59, %v59
    %v70 = vpack.c.bf16 %v60, %v60
    %v71 = vpack.c.bf16 %v61, %v61
    %v72 = vpack.c.bf16 %v62, %v62
    %v73 = vpack.c.bf16 %v63, %v63
    %v74 = vpack.c.bf16 %v64, %v64
    %v75 = vpack.c.bf16 %v65, %v65
    %v76 = vpack.c.bf16 %v66, %v66
    %v77 = vpack.c.bf16 %v67, %v67
    %v78 = vld [vmem:[#allocation2] sm:$0xff]
    %v79 = vld [vmem:[#allocation2 + $0x8] sm:$0xff]
    %v80 = vld [vmem:[#allocation2 + $0x10] sm:$0xff]
    %v81 = vld [vmem:[#allocation2 + $0x18] sm:$0xff]
    %v82 = vld [vmem:[#allocation2 + $0x20] sm:$0xff]
    %v83 = vld [vmem:[#allocation2 + $0x28] sm:$0xff]
    %v84 = vld [vmem:[#allocation2 + $0x30] sm:$0xff]
    %v85 = vld [vmem:[#allocation2 + $0x38] sm:$0xff]
    %v86 = vld [vmem:[#allocation2 + $0x40] sm:$0xff]
    %v87 = vld [vmem:[#allocation2 + $0x48] sm:$0xff]
    %v88 = vld [vmem:[#allocation2 + $0x50] sm:$0xff]
    %v89 = vld [vmem:[#allocation2 + $0x58] sm:$0xff]
    %v90 = vld [vmem:[#allocation2 + $0x60] sm:$0xff]
    %v91 = vld [vmem:[#allocation2 + $0x68] sm:$0xff]
    %v92 = vld [vmem:[#allocation2 + $0x70] sm:$0xff]
    %v93 = vld [vmem:[#allocation2 + $0x78] sm:$0xff]
    %v94 = vld [vmem:[#allocation2 + $0x80] sm:$0xff]
    %v95 = vld [vmem:[#allocation2 + $0x88] sm:$0xff]
    %v96 = vld [vmem:[#allocation2 + $0x90] sm:$0xff]
    %v97 = vld [vmem:[#allocation2 + $0x98] sm:$0xff]
    %v98 = vld [vmem:[#allocation2 + $0xa0] sm:$0xff]
    %v99 = vld [vmem:[#allocation2 + $0xa8] sm:$0xff]
    %v100 = vld [vmem:[#allocation2 + $0xb0] sm:$0xff]
    %v101 = vld [vmem:[#allocation2 + $0xb8] sm:$0xff]
    %v102 = vld [vmem:[#allocation2 + $0xc0] sm:$0xff]
    %v103 = vld [vmem:[#allocation2 + $0xc8] sm:$0xff]
    %v104 = vld [vmem:[#allocation2 + $0xd0] sm:$0xff]
    %v105 = vld [vmem:[#allocation2 + $0xd8] sm:$0xff]
    %v106 = vld [vmem:[#allocation2 + $0xe0] sm:$0xff]
    %v107 = vld [vmem:[#allocation2 + $0xe8] sm:$0xff]
    %v108 = vld [vmem:[#allocation2 + $0xf0] sm:$0xff]
    %v109 = vld [vmem:[#allocation2 + $0xf8] sm:$0xff]
    %v110 = vld [vmem:[#allocation2 + $0x100] sm:$0xff]
    %v111 = vld [vmem:[#allocation2 + $0x108] sm:$0xff]
    %v112 = vld [vmem:[#allocation2 + $0x110] sm:$0xff]
    %v113 = vld [vmem:[#allocation2 + $0x118] sm:$0xff]
    %v114 = vld [vmem:[#allocation2 + $0x120] sm:$0xff]
    %v115 = vld [vmem:[#allocation2 + $0x128] sm:$0xff]
    %v116 = vld [vmem:[#allocation2 + $0x130] sm:$0xff]
    %v117 = vld [vmem:[#allocation2 + $0x138] sm:$0xff]
    %v118 = vld [vmem:[#allocation2 + $0x140] sm:$0xff]
    %v119 = vld [vmem:[#allocation2 + $0x148] sm:$0xff]
    %v120 = vld [vmem:[#allocation2 + $0x150] sm:$0xff]
    %v121 = vld [vmem:[#allocation2 + $0x158] sm:$0xff]
    %v122 = vld [vmem:[#allocation2 + $0x160] sm:$0xff]
    %v123 = vld [vmem:[#allocation2 + $0x168] sm:$0xff]
    %v124 = vld [vmem:[#allocation2 + $0x170] sm:$0xff]
    %v125 = vld [vmem:[#allocation2 + $0x178] sm:$0xff]
    %v126 = vld [vmem:[#allocation2 + $0x180] sm:$0xff]
    %v127 = vld [vmem:[#allocation2 + $0x188] sm:$0xff]
    %v128 = vld [vmem:[#allocation2 + $0x190] sm:$0xff]
    %v129 = vld [vmem:[#allocation2 + $0x198] sm:$0xff]
    %v130 = vld [vmem:[#allocation2 + $0x1a0] sm:$0xff]
    %v131 = vld [vmem:[#allocation2 + $0x1a8] sm:$0xff]
    %v132 = vld [vmem:[#allocation2 + $0x1b0] sm:$0xff]
    %v133 = vld [vmem:[#allocation2 + $0x1b8] sm:$0xff]
    %v134 = vld [vmem:[#allocation2 + $0x1c0] sm:$0xff]
    %v135 = vld [vmem:[#allocation2 + $0x1c8] sm:$0xff]
    %v136 = vld [vmem:[#allocation2 + $0x1d0] sm:$0xff]
    %v137 = vld [vmem:[#allocation2 + $0x1d8] sm:$0xff]
    %v138 = vld [vmem:[#allocation2 + $0x1e0] sm:$0xff]
    %v139 = vld [vmem:[#allocation2 + $0x1e8] sm:$0xff]
    %v140 = vld [vmem:[#allocation2 + $0x1f0] sm:$0xff]
    %v141 = vld [vmem:[#allocation2 + $0x1f8] sm:$0xff]
    %v142 = vld [vmem:[#allocation2 + $0x200] sm:$0xff]
    %v143 = vld [vmem:[#allocation2 + $0x208] sm:$0xff]
    %v144 = vld [vmem:[#allocation2 + $0x210] sm:$0xff]
    %v145 = vld [vmem:[#allocation2 + $0x218] sm:$0xff]
    %v146 = vld [vmem:[#allocation2 + $0x220] sm:$0xff]
    %v147 = vld [vmem:[#allocation2 + $0x228] sm:$0xff]
    %v148 = vld [vmem:[#allocation2 + $0x230] sm:$0xff]
    %v149 = vld [vmem:[#allocation2 + $0x238] sm:$0xff]
    %v150 = vld [vmem:[#allocation2 + $0x240] sm:$0xff]
    %v151 = vld [vmem:[#allocation2 + $0x248] sm:$0xff]
    %v152 = vld [vmem:[#allocation2 + $0x250] sm:$0xff]
    %v153 = vld [vmem:[#allocation2 + $0x258] sm:$0xff]
    %v154 = vld [vmem:[#allocation2 + $0x260] sm:$0xff]
    %v155 = vld [vmem:[#allocation2 + $0x268] sm:$0xff]
    %v156 = vld [vmem:[#allocation2 + $0x270] sm:$0xff]
    %v157 = vld [vmem:[#allocation2 + $0x278] sm:$0xff]
    %v158 = vld [vmem:[#allocation2 + $0x280] sm:$0xff]
    %v159 = vld [vmem:[#allocation2 + $0x288] sm:$0xff]
    %v160 = vld [vmem:[#allocation2 + $0x290] sm:$0xff]
    %v161 = vld [vmem:[#allocation2 + $0x298] sm:$0xff]
    %v162 = vld [vmem:[#allocation2 + $0x2a0] sm:$0xff]
    %v163 = vld [vmem:[#allocation2 + $0x2a8] sm:$0xff]
    %v164 = vld [vmem:[#allocation2 + $0x2b0] sm:$0xff]
    %v165 = vld [vmem:[#allocation2 + $0x2b8] sm:$0xff]
    %v166 = vld [vmem:[#allocation2 + $0x2c0] sm:$0xff]
    %v167 = vld [vmem:[#allocation2 + $0x2c8] sm:$0xff]
    %v168 = vld [vmem:[#allocation2 + $0x2d0] sm:$0xff]
    %v169 = vld [vmem:[#allocation2 + $0x2d8] sm:$0xff]
    %v170 = vld [vmem:[#allocation2 + $0x2e0] sm:$0xff]
    %v171 = vld [vmem:[#allocation2 + $0x2e8] sm:$0xff]
    %v172 = vld [vmem:[#allocation2 + $0x2f0] sm:$0xff]
    %v173 = vld [vmem:[#allocation2 + $0x2f8] sm:$0xff]
    %v174 = vld [vmem:[#allocation2 + $0x300] sm:$0xff]
    %v175 = vld [vmem:[#allocation2 + $0x308] sm:$0xff]
    %v176 = vld [vmem:[#allocation2 + $0x310] sm:$0xff]
    %v177 = vld [vmem:[#allocation2 + $0x318] sm:$0xff]
    %v178 = vld [vmem:[#allocation2 + $0x320] sm:$0xff]
    %v179 = vld [vmem:[#allocation2 + $0x328] sm:$0xff]
    %v180 = vld [vmem:[#allocation2 + $0x330] sm:$0xff]
    %v181 = vld [vmem:[#allocation2 + $0x338] sm:$0xff]
    %v182 = vld [vmem:[#allocation2 + $0x340] sm:$0xff]
    %v183 = vld [vmem:[#allocation2 + $0x348] sm:$0xff]
    %v184 = vld [vmem:[#allocation2 + $0x350] sm:$0xff]
    %v185 = vld [vmem:[#allocation2 + $0x358] sm:$0xff]
    %v186 = vld [vmem:[#allocation2 + $0x360] sm:$0xff]
    %v187 = vld [vmem:[#allocation2 + $0x368] sm:$0xff]
    %v188 = vld [vmem:[#allocation2 + $0x370] sm:$0xff]
    %v189 = vld [vmem:[#allocation2 + $0x378] sm:$0xff]
    %v190 = vld [vmem:[#allocation2 + $0x380] sm:$0xff]
    %v191 = vld [vmem:[#allocation2 + $0x388] sm:$0xff]
    %v192 = vld [vmem:[#allocation2 + $0x390] sm:$0xff]
    %v193 = vld [vmem:[#allocation2 + $0x398] sm:$0xff]
    %v194 = vld [vmem:[#allocation2 + $0x3a0] sm:$0xff]
    %v195 = vld [vmem:[#allocation2 + $0x3a8] sm:$0xff]
    %v196 = vld [vmem:[#allocation2 + $0x3b0] sm:$0xff]
    %v197 = vld [vmem:[#allocation2 + $0x3b8] sm:$0xff]
    %v198 = vld [vmem:[#allocation2 + $0x3c0] sm:$0xff]
    %v199 = vld [vmem:[#allocation2 + $0x3c8] sm:$0xff]
    %v200 = vld [vmem:[#allocation2 + $0x3d0] sm:$0xff]
    %v201 = vld [vmem:[#allocation2 + $0x3d8] sm:$0xff]
    %v202 = vld [vmem:[#allocation2 + $0x3e0] sm:$0xff]
    %v203 = vld [vmem:[#allocation2 + $0x3e8] sm:$0xff]
    %v204 = vld [vmem:[#allocation2 + $0x3f0] sm:$0xff]
    %v205 = vld [vmem:[#allocation2 + $0x3f8] sm:$0xff]
    %v206 = vld [vmem:[#allocation2 + $0x400] sm:$0xff]
    %v207 = vld [vmem:[#allocation2 + $0x408] sm:$0xff]
    %v208 = vld [vmem:[#allocation2 + $0x410] sm:$0xff]
    %v209 = vld [vmem:[#allocation2 + $0x418] sm:$0xff]
    %v210 = vld [vmem:[#allocation2 + $0x420] sm:$0xff]
    %v211 = vld [vmem:[#allocation2 + $0x428] sm:$0xff]
    %v212 = vld [vmem:[#allocation2 + $0x430] sm:$0xff]
    %v213 = vld [vmem:[#allocation2 + $0x438] sm:$0xff]
    %v214 = vld [vmem:[#allocation2 + $0x440] sm:$0xff]
    %v215 = vld [vmem:[#allocation2 + $0x448] sm:$0xff]
    %v216 = vld [vmem:[#allocation2 + $0x450] sm:$0xff]
    %v217 = vld [vmem:[#allocation2 + $0x458] sm:$0xff]
    %v218 = vld [vmem:[#allocation2 + $0x460] sm:$0xff]
    %v219 = vld [vmem:[#allocation2 + $0x468] sm:$0xff]
    %v220 = vld [vmem:[#allocation2 + $0x470] sm:$0xff]
    %v221 = vld [vmem:[#allocation2 + $0x478] sm:$0xff]
    %v222 = vld [vmem:[#allocation2 + $0x480] sm:$0xff]
    %v223 = vld [vmem:[#allocation2 + $0x488] sm:$0xff]
    %v224 = vld [vmem:[#allocation2 + $0x490] sm:$0xff]
    %v225 = vld [vmem:[#allocation2 + $0x498] sm:$0xff]
    %v226 = vld [vmem:[#allocation2 + $0x4a0] sm:$0xff]
    %v227 = vld [vmem:[#allocation2 + $0x4a8] sm:$0xff]
    %v228 = vld [vmem:[#allocation2 + $0x4b0] sm:$0xff]
    %v229 = vld [vmem:[#allocation2 + $0x4b8] sm:$0xff]
    %v230 = vld [vmem:[#allocation2 + $0x4c0] sm:$0xff]
    %v231 = vld [vmem:[#allocation2 + $0x4c8] sm:$0xff]
    %v232 = vld [vmem:[#allocation2 + $0x4d0] sm:$0xff]
    %v233 = vld [vmem:[#allocation2 + $0x4d8] sm:$0xff]
    %v234 = vld [vmem:[#allocation2 + $0x4e0] sm:$0xff]
    %v235 = vld [vmem:[#allocation2 + $0x4e8] sm:$0xff]
    %v236 = vld [vmem:[#allocation2 + $0x4f0] sm:$0xff]
    %v237 = vld [vmem:[#allocation2 + $0x4f8] sm:$0xff]
    %v238 = vld [vmem:[#allocation2 + $0x500] sm:$0xff]
    %v239 = vld [vmem:[#allocation2 + $0x508] sm:$0xff]
    %v240 = vld [vmem:[#allocation2 + $0x510] sm:$0xff]
    %v241 = vld [vmem:[#allocation2 + $0x518] sm:$0xff]
    %v242 = vld [vmem:[#allocation2 + $0x520] sm:$0xff]
    %v243 = vld [vmem:[#allocation2 + $0x528] sm:$0xff]
    %v244 = vld [vmem:[#allocation2 + $0x530] sm:$0xff]
    %v245 = vld [vmem:[#allocation2 + $0x538] sm:$0xff]
    %v246 = vld [vmem:[#allocation2 + $0x540] sm:$0xff]
    %v247 = vld [vmem:[#allocation2 + $0x548] sm:$0xff]
    %v248 = vld [vmem:[#allocation2 + $0x550] sm:$0xff]
    %v249 = vld [vmem:[#allocation2 + $0x558] sm:$0xff]
    %v250 = vld [vmem:[#allocation2 + $0x560] sm:$0xff]
    %v251 = vld [vmem:[#allocation2 + $0x568] sm:$0xff]
    %v252 = vld [vmem:[#allocation2 + $0x570] sm:$0xff]
    %v253 = vld [vmem:[#allocation2 + $0x578] sm:$0xff]
    %v254 = vld [vmem:[#allocation2 + $0x580] sm:$0xff]
    %v255 = vld [vmem:[#allocation2 + $0x588] sm:$0xff]
    %v256 = vld [vmem:[#allocation2 + $0x590] sm:$0xff]
    %v257 = vld [vmem:[#allocation2 + $0x598] sm:$0xff]
    %v258 = vld [vmem:[#allocation2 + $0x5a0] sm:$0xff]
    %v259 = vld [vmem:[#allocation2 + $0x5a8] sm:$0xff]
    %v260 = vld [vmem:[#allocation2 + $0x5b0] sm:$0xff]
    %v261 = vld [vmem:[#allocation2 + $0x5b8] sm:$0xff]
    %v262 = vld [vmem:[#allocation2 + $0x5c0] sm:$0xff]
    %v263 = vld [vmem:[#allocation2 + $0x5c8] sm:$0xff]
    %v264 = vld [vmem:[#allocation2 + $0x5d0] sm:$0xff]
    %v265 = vld [vmem:[#allocation2 + $0x5d8] sm:$0xff]
    %v266 = vld [vmem:[#allocation2 + $0x5e0] sm:$0xff]
    %v267 = vld [vmem:[#allocation2 + $0x5e8] sm:$0xff]
    %v268 = vld [vmem:[#allocation2 + $0x5f0] sm:$0xff]
    %v269 = vld [vmem:[#allocation2 + $0x5f8] sm:$0xff]
    %v270 = vld [vmem:[#allocation2 + $0x600] sm:$0xff]
    %v271 = vld [vmem:[#allocation2 + $0x608] sm:$0xff]
    %v272 = vld [vmem:[#allocation2 + $0x610] sm:$0xff]
    %v273 = vld [vmem:[#allocation2 + $0x618] sm:$0xff]
    %v274 = vld [vmem:[#allocation2 + $0x620] sm:$0xff]
    %v275 = vld [vmem:[#allocation2 + $0x628] sm:$0xff]
    %v276 = vld [vmem:[#allocation2 + $0x630] sm:$0xff]
    %v277 = vld [vmem:[#allocation2 + $0x638] sm:$0xff]
    %v278 = vld [vmem:[#allocation2 + $0x640] sm:$0xff]
    %v279 = vld [vmem:[#allocation2 + $0x648] sm:$0xff]
    %v280 = vld [vmem:[#allocation2 + $0x650] sm:$0xff]
    %v281 = vld [vmem:[#allocation2 + $0x658] sm:$0xff]
    %v282 = vld [vmem:[#allocation2 + $0x660] sm:$0xff]
    %v283 = vld [vmem:[#allocation2 + $0x668] sm:$0xff]
    %v284 = vld [vmem:[#allocation2 + $0x670] sm:$0xff]
    %v285 = vld [vmem:[#allocation2 + $0x678] sm:$0xff]
    %v286 = vld [vmem:[#allocation2 + $0x680] sm:$0xff]
    %v287 = vld [vmem:[#allocation2 + $0x688] sm:$0xff]
    %v288 = vld [vmem:[#allocation2 + $0x690] sm:$0xff]
    %v289 = vld [vmem:[#allocation2 + $0x698] sm:$0xff]
    %v290 = vld [vmem:[#allocation2 + $0x6a0] sm:$0xff]
    %v291 = vld [vmem:[#allocation2 + $0x6a8] sm:$0xff]
    %v292 = vld [vmem:[#allocation2 + $0x6b0] sm:$0xff]
    %v293 = vld [vmem:[#allocation2 + $0x6b8] sm:$0xff]
    %v294 = vld [vmem:[#allocation2 + $0x6c0] sm:$0xff]
    %v295 = vld [vmem:[#allocation2 + $0x6c8] sm:$0xff]
    %v296 = vld [vmem:[#allocation2 + $0x6d0] sm:$0xff]
    %v297 = vld [vmem:[#allocation2 + $0x6d8] sm:$0xff]
    %v298 = vld [vmem:[#allocation2 + $0x6e0] sm:$0xff]
    %v299 = vld [vmem:[#allocation2 + $0x6e8] sm:$0xff]
    %v300 = vld [vmem:[#allocation2 + $0x6f0] sm:$0xff]
    %v301 = vld [vmem:[#allocation2 + $0x6f8] sm:$0xff]
    %v302 = vld [vmem:[#allocation2 + $0x700] sm:$0xff]
    %v303 = vld [vmem:[#allocation2 + $0x708] sm:$0xff]
    %v304 = vld [vmem:[#allocation2 + $0x710] sm:$0xff]
    %v305 = vld [vmem:[#allocation2 + $0x718] sm:$0xff]
    %v306 = vld [vmem:[#allocation2 + $0x720] sm:$0xff]
    %v307 = vld [vmem:[#allocation2 + $0x728] sm:$0xff]
    %v308 = vld [vmem:[#allocation2 + $0x730] sm:$0xff]
    %v309 = vld [vmem:[#allocation2 + $0x738] sm:$0xff]
    %v310 = vld [vmem:[#allocation2 + $0x740] sm:$0xff]
    %v311 = vld [vmem:[#allocation2 + $0x748] sm:$0xff]
    %v312 = vld [vmem:[#allocation2 + $0x750] sm:$0xff]
    %v313 = vld [vmem:[#allocation2 + $0x758] sm:$0xff]
    %v314 = vld [vmem:[#allocation2 + $0x760] sm:$0xff]
    %v315 = vld [vmem:[#allocation2 + $0x768] sm:$0xff]
    %v316 = vld [vmem:[#allocation2 + $0x770] sm:$0xff]
    %v317 = vld [vmem:[#allocation2 + $0x778] sm:$0xff]
    %v318 = vld [vmem:[#allocation2 + $0x780] sm:$0xff]
    %v319 = vld [vmem:[#allocation2 + $0x788] sm:$0xff]
    %v320 = vld [vmem:[#allocation2 + $0x790] sm:$0xff]
    %v321 = vld [vmem:[#allocation2 + $0x798] sm:$0xff]
    %v322 = vld [vmem:[#allocation2 + $0x7a0] sm:$0xff]
    %v323 = vld [vmem:[#allocation2 + $0x7a8] sm:$0xff]
    %v324 = vld [vmem:[#allocation2 + $0x7b0] sm:$0xff]
    %v325 = vld [vmem:[#allocation2 + $0x7b8] sm:$0xff]
    %v326 = vld [vmem:[#allocation2 + $0x7c0] sm:$0xff]
    %v327 = vld [vmem:[#allocation2 + $0x7c8] sm:$0xff]
    %v328 = vld [vmem:[#allocation2 + $0x7d0] sm:$0xff]
    %v329 = vld [vmem:[#allocation2 + $0x7d8] sm:$0xff]
    %v330 = vld [vmem:[#allocation2 + $0x7e0] sm:$0xff]
    %v331 = vld [vmem:[#allocation2 + $0x7e8] sm:$0xff]
    %v332 = vld [vmem:[#allocation2 + $0x7f0] sm:$0xff]
    %v333 = vld [vmem:[#allocation2 + $0x7f8] sm:$0xff]
    %v334 = vld [vmem:[#allocation2 + $0x800] sm:$0xff]
    %v335 = vld [vmem:[#allocation2 + $0x808] sm:$0xff]
    %v336 = vld [vmem:[#allocation2 + $0x810] sm:$0xff]
    %v337 = vld [vmem:[#allocation2 + $0x818] sm:$0xff]
    %v338 = vld [vmem:[#allocation2 + $0x820] sm:$0xff]
    %v339 = vld [vmem:[#allocation2 + $0x828] sm:$0xff]
    %v340 = vld [vmem:[#allocation2 + $0x830] sm:$0xff]
    %v341 = vld [vmem:[#allocation2 + $0x838] sm:$0xff]
    %v342 = vld [vmem:[#allocation2 + $0x840] sm:$0xff]
    %v343 = vld [vmem:[#allocation2 + $0x848] sm:$0xff]
    %v344 = vld [vmem:[#allocation2 + $0x850] sm:$0xff]
    %v345 = vld [vmem:[#allocation2 + $0x858] sm:$0xff]
    %v346 = vld [vmem:[#allocation2 + $0x860] sm:$0xff]
    %v347 = vld [vmem:[#allocation2 + $0x868] sm:$0xff]
    %v348 = vld [vmem:[#allocation2 + $0x870] sm:$0xff]
    %v349 = vld [vmem:[#allocation2 + $0x878] sm:$0xff]
    %v350 = vld [vmem:[#allocation2 + $0x880] sm:$0xff]
    %v351 = vld [vmem:[#allocation2 + $0x888] sm:$0xff]
    %v352 = vld [vmem:[#allocation2 + $0x890] sm:$0xff]
    %v353 = vld [vmem:[#allocation2 + $0x898] sm:$0xff]
    %v354 = vld [vmem:[#allocation2 + $0x8a0] sm:$0xff]
    %v355 = vld [vmem:[#allocation2 + $0x8a8] sm:$0xff]
    %v356 = vld [vmem:[#allocation2 + $0x8b0] sm:$0xff]
    %v357 = vld [vmem:[#allocation2 + $0x8b8] sm:$0xff]
    %v358 = vld [vmem:[#allocation2 + $0x8c0] sm:$0xff]
    %v359 = vld [vmem:[#allocation2 + $0x8c8] sm:$0xff]
    %v360 = vld [vmem:[#allocation2 + $0x8d0] sm:$0xff]
    %v361 = vld [vmem:[#allocation2 + $0x8d8] sm:$0xff]
    %v362 = vld [vmem:[#allocation2 + $0x8e0] sm:$0xff]
    %v363 = vld [vmem:[#allocation2 + $0x8e8] sm:$0xff]
    %v364 = vld [vmem:[#allocation2 + $0x8f0] sm:$0xff]
    %v365 = vld [vmem:[#allocation2 + $0x8f8] sm:$0xff]
    %v366 = vld [vmem:[#allocation2 + $0x900] sm:$0xff]
    %v367 = vld [vmem:[#allocation2 + $0x908] sm:$0xff]
    %v368 = vld [vmem:[#allocation2 + $0x910] sm:$0xff]
    %v369 = vld [vmem:[#allocation2 + $0x918] sm:$0xff]
    %v370 = vld [vmem:[#allocation2 + $0x920] sm:$0xff]
    %v371 = vld [vmem:[#allocation2 + $0x928] sm:$0xff]
    %v372 = vld [vmem:[#allocation2 + $0x930] sm:$0xff]
    %v373 = vld [vmem:[#allocation2 + $0x938] sm:$0xff]
    %v374 = vld [vmem:[#allocation2 + $0x940] sm:$0xff]
    %v375 = vld [vmem:[#allocation2 + $0x948] sm:$0xff]
    %v376 = vld [vmem:[#allocation2 + $0x950] sm:$0xff]
    %v377 = vld [vmem:[#allocation2 + $0x958] sm:$0xff]
    %v378 = vld [vmem:[#allocation4] sm:$0xf]
    %v380 = vlaneseq
    %v381 = vshrl.u32 %v380, 7
    %v382 = vsub.s32 0, %v381
    %v383 = vrot.slane %v378, %v382
    %v384 = vlaneseq
    %v385 = vshrl.u32 %v384, 7
    %v386 = vsub.s32 1, %v385
    %v387 = vrot.slane %v378, %v386
    %v388 = vlaneseq
    %v389 = vshrl.u32 %v388, 7
    %v390 = vsub.s32 2, %v389
    %v391 = vrot.slane %v378, %v390
    %v392 = vlaneseq
    %v393 = vshrl.u32 %v392, 7
    %v394 = vsub.s32 3, %v393
    %v395 = vrot.slane %v378, %v394
    %v700 = vunpack.c.l.b16 %v78
    %v701 = vunpack.c.h.b16 %v78
    %v702 = vunpack.c.l.b16 %v79
    %v703 = vunpack.c.h.b16 %v79
    %v704 = vunpack.c.l.b16 %v80
    %v705 = vunpack.c.h.b16 %v80
    %v706 = vunpack.c.l.b16 %v81
    %v707 = vunpack.c.h.b16 %v81
    %v708 = vunpack.c.l.b16 %v82
    %v709 = vunpack.c.h.b16 %v82
    %v710 = vunpack.c.l.b16 %v83
    %v711 = vunpack.c.h.b16 %v83
    %v712 = vunpack.c.l.b16 %v84
    %v713 = vunpack.c.h.b16 %v84
    %v714 = vunpack.c.l.b16 %v85
    %v715 = vunpack.c.h.b16 %v85
    %v716 = vunpack.c.l.b16 %v86
    %v717 = vunpack.c.h.b16 %v86
    %v718 = vunpack.c.l.b16 %v87
    %v719 = vunpack.c.h.b16 %v87
    %v720 = vunpack.c.l.b16 %v88
    %v721 = vunpack.c.h.b16 %v88
    %v722 = vunpack.c.l.b16 %v89
    %v723 = vunpack.c.h.b16 %v89
    %v724 = vunpack.c.l.b16 %v90
    %v725 = vunpack.c.h.b16 %v90
    %v726 = vunpack.c.l.b16 %v91
    %v727 = vunpack.c.h.b16 %v91
    %v728 = vunpack.c.l.b16 %v92
    %v729 = vunpack.c.h.b16 %v92
    %v730 = vunpack.c.l.b16 %v93
    %v731 = vunpack.c.h.b16 %v93
    %v732 = vunpack.c.l.b16 %v94
    %v733 = vunpack.c.h.b16 %v94
    %v734 = vunpack.c.l.b16 %v95
    %v735 = vunpack.c.h.b16 %v95
    %v736 = vunpack.c.l.b16 %v96
    %v737 = vunpack.c.h.b16 %v96
    %v738 = vunpack.c.l.b16 %v97
    %v739 = vunpack.c.h.b16 %v97
    %v740 = vunpack.c.l.b16 %v98
    %v741 = vunpack.c.h.b16 %v98
    %v742 = vunpack.c.l.b16 %v99
    %v743 = vunpack.c.h.b16 %v99
    %v744 = vunpack.c.l.b16 %v100
    %v745 = vunpack.c.h.b16 %v100
    %v746 = vunpack.c.l.b16 %v101
    %v747 = vunpack.c.h.b16 %v101
    %v748 = vunpack.c.l.b16 %v102
    %v749 = vunpack.c.h.b16 %v102
    %v750 = vunpack.c.l.b16 %v103
    %v751 = vunpack.c.h.b16 %v103
    %v752 = vunpack.c.l.b16 %v104
    %v753 = vunpack.c.h.b16 %v104
    %v754 = vunpack.c.l.b16 %v105
    %v755 = vunpack.c.h.b16 %v105
    %v756 = vunpack.c.l.b16 %v106
    %v757 = vunpack.c.h.b16 %v106
    %v758 = vunpack.c.l.b16 %v107
    %v759 = vunpack.c.h.b16 %v107
    %v760 = vunpack.c.l.b16 %v108
    %v761 = vunpack.c.h.b16 %v108
    %v762 = vunpack.c.l.b16 %v109
    %v763 = vunpack.c.h.b16 %v109
    %v764 = vunpack.c.l.b16 %v110
    %v765 = vunpack.c.h.b16 %v110
    %v766 = vunpack.c.l.b16 %v111
    %v767 = vunpack.c.h.b16 %v111
    %v768 = vunpack.c.l.b16 %v112
    %v769 = vunpack.c.h.b16 %v112
    %v770 = vunpack.c.l.b16 %v113
    %v771 = vunpack.c.h.b16 %v113
    %v772 = vunpack.c.l.b16 %v114
    %v773 = vunpack.c.h.b16 %v114
    %v774 = vunpack.c.l.b16 %v115
    %v775 = vunpack.c.h.b16 %v115
    %v776 = vunpack.c.l.b16 %v116
    %v777 = vunpack.c.h.b16 %v116
    %v778 = vunpack.c.l.b16 %v117
    %v779 = vunpack.c.h.b16 %v117
    %v780 = vunpack.c.l.b16 %v118
    %v781 = vunpack.c.h.b16 %v118
    %v782 = vunpack.c.l.b16 %v119
    %v783 = vunpack.c.h.b16 %v119
    %v784 = vunpack.c.l.b16 %v120
    %v785 = vunpack.c.h.b16 %v120
    %v786 = vunpack.c.l.b16 %v121
    %v787 = vunpack.c.h.b16 %v121
    %v788 = vunpack.c.l.b16 %v122
    %v789 = vunpack.c.h.b16 %v122
    %v790 = vunpack.c.l.b16 %v123
    %v791 = vunpack.c.h.b16 %v123
    %v792 = vunpack.c.l.b16 %v124
    %v793 = vunpack.c.h.b16 %v124
    %v794 = vunpack.c.l.b16 %v125
    %v795 = vunpack.c.h.b16 %v125
    %v796 = vunpack.c.l.b16 %v126
    %v797 = vunpack.c.h.b16 %v126
    %v798 = vunpack.c.l.b16 %v127
    %v799 = vunpack.c.h.b16 %v127
    %v800 = vunpack.c.l.b16 %v128
    %v801 = vunpack.c.h.b16 %v128
    %v802 = vunpack.c.l.b16 %v129
    %v803 = vunpack.c.h.b16 %v129
    %v804 = vunpack.c.l.b16 %v130
    %v805 = vunpack.c.h.b16 %v130
    %v806 = vunpack.c.l.b16 %v131
    %v807 = vunpack.c.h.b16 %v131
    %v808 = vunpack.c.l.b16 %v132
    %v809 = vunpack.c.h.b16 %v132
    %v810 = vunpack.c.l.b16 %v133
    %v811 = vunpack.c.h.b16 %v133
    %v812 = vunpack.c.l.b16 %v134
    %v813 = vunpack.c.h.b16 %v134
    %v814 = vunpack.c.l.b16 %v135
    %v815 = vunpack.c.h.b16 %v135
    %v816 = vunpack.c.l.b16 %v136
    %v817 = vunpack.c.h.b16 %v136
    %v818 = vunpack.c.l.b16 %v137
    %v819 = vunpack.c.h.b16 %v137
    %v820 = vunpack.c.l.b16 %v138
    %v821 = vunpack.c.h.b16 %v138
    %v822 = vunpack.c.l.b16 %v139
    %v823 = vunpack.c.h.b16 %v139
    %v824 = vunpack.c.l.b16 %v140
    %v825 = vunpack.c.h.b16 %v140
    %v826 = vunpack.c.l.b16 %v141
    %v827 = vunpack.c.h.b16 %v141
    %v828 = vunpack.c.l.b16 %v142
    %v829 = vunpack.c.h.b16 %v142
    %v830 = vunpack.c.l.b16 %v143
    %v831 = vunpack.c.h.b16 %v143
    %v832 = vunpack.c.l.b16 %v144
    %v833 = vunpack.c.h.b16 %v144
    %v834 = vunpack.c.l.b16 %v145
    %v835 = vunpack.c.h.b16 %v145
    %v836 = vunpack.c.l.b16 %v146
    %v837 = vunpack.c.h.b16 %v146
    %v838 = vunpack.c.l.b16 %v147
    %v839 = vunpack.c.h.b16 %v147
    %v840 = vunpack.c.l.b16 %v148
    %v841 = vunpack.c.h.b16 %v148
    %v842 = vunpack.c.l.b16 %v149
    %v843 = vunpack.c.h.b16 %v149
    %v844 = vunpack.c.l.b16 %v150
    %v845 = vunpack.c.h.b16 %v150
    %v846 = vunpack.c.l.b16 %v151
    %v847 = vunpack.c.h.b16 %v151
    %v848 = vunpack.c.l.b16 %v152
    %v849 = vunpack.c.h.b16 %v152
    %v850 = vunpack.c.l.b16 %v153
    %v851 = vunpack.c.h.b16 %v153
    %v852 = vunpack.c.l.b16 %v154
    %v853 = vunpack.c.h.b16 %v154
    %v854 = vunpack.c.l.b16 %v155
    %v855 = vunpack.c.h.b16 %v155
    %v856 = vunpack.c.l.b16 %v156
    %v857 = vunpack.c.h.b16 %v156
    %v858 = vunpack.c.l.b16 %v157
    %v859 = vunpack.c.h.b16 %v157
    %v860 = vunpack.c.l.b16 %v158
    %v861 = vunpack.c.h.b16 %v158
    %v862 = vunpack.c.l.b16 %v159
    %v863 = vunpack.c.h.b16 %v159
    %v864 = vunpack.c.l.b16 %v160
    %v865 = vunpack.c.h.b16 %v160
    %v866 = vunpack.c.l.b16 %v161
    %v867 = vunpack.c.h.b16 %v161
    %v868 = vunpack.c.l.b16 %v162
    %v869 = vunpack.c.h.b16 %v162
    %v870 = vunpack.c.l.b16 %v163
    %v871 = vunpack.c.h.b16 %v163
    %v872 = vunpack.c.l.b16 %v164
    %v873 = vunpack.c.h.b16 %v164
    %v874 = vunpack.c.l.b16 %v165
    %v875 = vunpack.c.h.b16 %v165
    %v876 = vunpack.c.l.b16 %v166
    %v877 = vunpack.c.h.b16 %v166
    %v878 = vunpack.c.l.b16 %v167
    %v879 = vunpack.c.h.b16 %v167
    %v880 = vunpack.c.l.b16 %v168
    %v881 = vunpack.c.h.b16 %v168
    %v882 = vunpack.c.l.b16 %v169
    %v883 = vunpack.c.h.b16 %v169
    %v884 = vunpack.c.l.b16 %v170
    %v885 = vunpack.c.h.b16 %v170
    %v886 = vunpack.c.l.b16 %v171
    %v887 = vunpack.c.h.b16 %v171
    %v888 = vunpack.c.l.b16 %v172
    %v889 = vunpack.c.h.b16 %v172
    %v890 = vunpack.c.l.b16 %v173
    %v891 = vunpack.c.h.b16 %v173
    %v892 = vunpack.c.l.b16 %v174
    %v893 = vunpack.c.h.b16 %v174
    %v894 = vunpack.c.l.b16 %v175
    %v895 = vunpack.c.h.b16 %v175
    %v896 = vunpack.c.l.b16 %v176
    %v897 = vunpack.c.h.b16 %v176
    %v898 = vunpack.c.l.b16 %v177
    %v899 = vunpack.c.h.b16 %v177
    %v900 = vunpack.c.l.b16 %v178
    %v901 = vunpack.c.h.b16 %v178
    %v902 = vunpack.c.l.b16 %v179
    %v903 = vunpack.c.h.b16 %v179
    %v904 = vunpack.c.l.b16 %v180
    %v905 = vunpack.c.h.b16 %v180
    %v906 = vunpack.c.l.b16 %v181
    %v907 = vunpack.c.h.b16 %v181
    %v908 = vunpack.c.l.b16 %v182
    %v909 = vunpack.c.h.b16 %v182
    %v910 = vunpack.c.l.b16 %v183
    %v911 = vunpack.c.h.b16 %v183
    %v912 = vunpack.c.l.b16 %v184
    %v913 = vunpack.c.h.b16 %v184
    %v914 = vunpack.c.l.b16 %v185
    %v915 = vunpack.c.h.b16 %v185
    %v916 = vunpack.c.l.b16 %v186
    %v917 = vunpack.c.h.b16 %v186
    %v918 = vunpack.c.l.b16 %v187
    %v919 = vunpack.c.h.b16 %v187
    %v920 = vunpack.c.l.b16 %v188
    %v921 = vunpack.c.h.b16 %v188
    %v922 = vunpack.c.l.b16 %v189
    %v923 = vunpack.c.h.b16 %v189
    %v924 = vunpack.c.l.b16 %v190
    %v925 = vunpack.c.h.b16 %v190
    %v926 = vunpack.c.l.b16 %v191
    %v927 = vunpack.c.h.b16 %v191
    %v928 = vunpack.c.l.b16 %v192
    %v929 = vunpack.c.h.b16 %v192
    %v930 = vunpack.c.l.b16 %v193
    %v931 = vunpack.c.h.b16 %v193
    %v932 = vunpack.c.l.b16 %v194
    %v933 = vunpack.c.h.b16 %v194
    %v934 = vunpack.c.l.b16 %v195
    %v935 = vunpack.c.h.b16 %v195
    %v936 = vunpack.c.l.b16 %v196
    %v937 = vunpack.c.h.b16 %v196
    %v938 = vunpack.c.l.b16 %v197
    %v939 = vunpack.c.h.b16 %v197
    %v940 = vunpack.c.l.b16 %v198
    %v941 = vunpack.c.h.b16 %v198
    %v942 = vunpack.c.l.b16 %v199
    %v943 = vunpack.c.h.b16 %v199
    %v944 = vunpack.c.l.b16 %v200
    %v945 = vunpack.c.h.b16 %v200
    %v946 = vunpack.c.l.b16 %v201
    %v947 = vunpack.c.h.b16 %v201
    %v948 = vunpack.c.l.b16 %v202
    %v949 = vunpack.c.h.b16 %v202
    %v950 = vunpack.c.l.b16 %v203
    %v951 = vunpack.c.h.b16 %v203
    %v952 = vunpack.c.l.b16 %v204
    %v953 = vunpack.c.h.b16 %v204
    %v954 = vunpack.c.l.b16 %v205
    %v955 = vunpack.c.h.b16 %v205
    %v956 = vunpack.c.l.b16 %v206
    %v957 = vunpack.c.h.b16 %v206
    %v958 = vunpack.c.l.b16 %v207
    %v959 = vunpack.c.h.b16 %v207
    %v960 = vunpack.c.l.b16 %v208
    %v961 = vunpack.c.h.b16 %v208
    %v962 = vunpack.c.l.b16 %v209
    %v963 = vunpack.c.h.b16 %v209
    %v964 = vunpack.c.l.b16 %v210
    %v965 = vunpack.c.h.b16 %v210
    %v966 = vunpack.c.l.b16 %v211
    %v967 = vunpack.c.h.b16 %v211
    %v968 = vunpack.c.l.b16 %v212
    %v969 = vunpack.c.h.b16 %v212
    %v970 = vunpack.c.l.b16 %v213
    %v971 = vunpack.c.h.b16 %v213
    %v972 = vunpack.c.l.b16 %v214
    %v973 = vunpack.c.h.b16 %v214
    %v974 = vunpack.c.l.b16 %v215
    %v975 = vunpack.c.h.b16 %v215
    %v976 = vunpack.c.l.b16 %v216
    %v977 = vunpack.c.h.b16 %v216
    %v978 = vunpack.c.l.b16 %v217
    %v979 = vunpack.c.h.b16 %v217
    %v980 = vunpack.c.l.b16 %v218
    %v981 = vunpack.c.h.b16 %v218
    %v982 = vunpack.c.l.b16 %v219
    %v983 = vunpack.c.h.b16 %v219
    %v984 = vunpack.c.l.b16 %v220
    %v985 = vunpack.c.h.b16 %v220
    %v986 = vunpack.c.l.b16 %v221
    %v987 = vunpack.c.h.b16 %v221
    %v988 = vunpack.c.l.b16 %v222
    %v989 = vunpack.c.h.b16 %v222
    %v990 = vunpack.c.l.b16 %v223
    %v991 = vunpack.c.h.b16 %v223
    %v992 = vunpack.c.l.b16 %v224
    %v993 = vunpack.c.h.b16 %v224
    %v994 = vunpack.c.l.b16 %v225
    %v995 = vunpack.c.h.b16 %v225
    %v996 = vunpack.c.l.b16 %v226
    %v997 = vunpack.c.h.b16 %v226
    %v998 = vunpack.c.l.b16 %v227
    %v999 = vunpack.c.h.b16 %v227
    %v1000 = vunpack.c.l.b16 %v228
    %v1001 = vunpack.c.h.b16 %v228
    %v1002 = vunpack.c.l.b16 %v229
    %v1003 = vunpack.c.h.b16 %v229
    %v1004 = vunpack.c.l.b16 %v230
    %v1005 = vunpack.c.h.b16 %v230
    %v1006 = vunpack.c.l.b16 %v231
    %v1007 = vunpack.c.h.b16 %v231
    %v1008 = vunpack.c.l.b16 %v232
    %v1009 = vunpack.c.h.b16 %v232
    %v1010 = vunpack.c.l.b16 %v233
    %v1011 = vunpack.c.h.b16 %v233
    %v1012 = vunpack.c.l.b16 %v234
    %v1013 = vunpack.c.h.b16 %v234
    %v1014 = vunpack.c.l.b16 %v235
    %v1015 = vunpack.c.h.b16 %v235
    %v1016 = vunpack.c.l.b16 %v236
    %v1017 = vunpack.c.h.b16 %v236
    %v1018 = vunpack.c.l.b16 %v237
    %v1019 = vunpack.c.h.b16 %v237
    %v1020 = vunpack.c.l.b16 %v238
    %v1021 = vunpack.c.h.b16 %v238
    %v1022 = vunpack.c.l.b16 %v239
    %v1023 = vunpack.c.h.b16 %v239
    %v1024 = vunpack.c.l.b16 %v240
    %v1025 = vunpack.c.h.b16 %v240
    %v1026 = vunpack.c.l.b16 %v241
    %v1027 = vunpack.c.h.b16 %v241
    %v1028 = vunpack.c.l.b16 %v242
    %v1029 = vunpack.c.h.b16 %v242
    %v1030 = vunpack.c.l.b16 %v243
    %v1031 = vunpack.c.h.b16 %v243
    %v1032 = vunpack.c.l.b16 %v244
    %v1033 = vunpack.c.h.b16 %v244
    %v1034 = vunpack.c.l.b16 %v245
    %v1035 = vunpack.c.h.b16 %v245
    %v1036 = vunpack.c.l.b16 %v246
    %v1037 = vunpack.c.h.b16 %v246
    %v1038 = vunpack.c.l.b16 %v247
    %v1039 = vunpack.c.h.b16 %v247
    %v1040 = vunpack.c.l.b16 %v248
    %v1041 = vunpack.c.h.b16 %v248
    %v1042 = vunpack.c.l.b16 %v249
    %v1043 = vunpack.c.h.b16 %v249
    %v1044 = vunpack.c.l.b16 %v250
    %v1045 = vunpack.c.h.b16 %v250
    %v1046 = vunpack.c.l.b16 %v251
    %v1047 = vunpack.c.h.b16 %v251
    %v1048 = vunpack.c.l.b16 %v252
    %v1049 = vunpack.c.h.b16 %v252
    %v1050 = vunpack.c.l.b16 %v253
    %v1051 = vunpack.c.h.b16 %v253
    %v1052 = vunpack.c.l.b16 %v254
    %v1053 = vunpack.c.h.b16 %v254
    %v1054 = vunpack.c.l.b16 %v255
    %v1055 = vunpack.c.h.b16 %v255
    %v1056 = vunpack.c.l.b16 %v256
    %v1057 = vunpack.c.h.b16 %v256
    %v1058 = vunpack.c.l.b16 %v257
    %v1059 = vunpack.c.h.b16 %v257
    %v1060 = vunpack.c.l.b16 %v258
    %v1061 = vunpack.c.h.b16 %v258
    %v1062 = vunpack.c.l.b16 %v259
    %v1063 = vunpack.c.h.b16 %v259
    %v1064 = vunpack.c.l.b16 %v260
    %v1065 = vunpack.c.h.b16 %v260
    %v1066 = vunpack.c.l.b16 %v261
    %v1067 = vunpack.c.h.b16 %v261
    %v1068 = vunpack.c.l.b16 %v262
    %v1069 = vunpack.c.h.b16 %v262
    %v1070 = vunpack.c.l.b16 %v263
    %v1071 = vunpack.c.h.b16 %v263
    %v1072 = vunpack.c.l.b16 %v264
    %v1073 = vunpack.c.h.b16 %v264
    %v1074 = vunpack.c.l.b16 %v265
    %v1075 = vunpack.c.h.b16 %v265
    %v1076 = vunpack.c.l.b16 %v266
    %v1077 = vunpack.c.h.b16 %v266
    %v1078 = vunpack.c.l.b16 %v267
    %v1079 = vunpack.c.h.b16 %v267
    %v1080 = vunpack.c.l.b16 %v268
    %v1081 = vunpack.c.h.b16 %v268
    %v1082 = vunpack.c.l.b16 %v269
    %v1083 = vunpack.c.h.b16 %v269
    %v1084 = vunpack.c.l.b16 %v270
    %v1085 = vunpack.c.h.b16 %v270
    %v1086 = vunpack.c.l.b16 %v271
    %v1087 = vunpack.c.h.b16 %v271
    %v1088 = vunpack.c.l.b16 %v272
    %v1089 = vunpack.c.h.b16 %v272
    %v1090 = vunpack.c.l.b16 %v273
    %v1091 = vunpack.c.h.b16 %v273
    %v1092 = vunpack.c.l.b16 %v274
    %v1093 = vunpack.c.h.b16 %v274
    %v1094 = vunpack.c.l.b16 %v275
    %v1095 = vunpack.c.h.b16 %v275
    %v1096 = vunpack.c.l.b16 %v276
    %v1097 = vunpack.c.h.b16 %v276
    %v1098 = vunpack.c.l.b16 %v277
    %v1099 = vunpack.c.h.b16 %v277
    %v1100 = vunpack.c.l.b16 %v278
    %v1101 = vunpack.c.h.b16 %v278
    %v1102 = vunpack.c.l.b16 %v279
    %v1103 = vunpack.c.h.b16 %v279
    %v1104 = vunpack.c.l.b16 %v280
    %v1105 = vunpack.c.h.b16 %v280
    %v1106 = vunpack.c.l.b16 %v281
    %v1107 = vunpack.c.h.b16 %v281
    %v1108 = vunpack.c.l.b16 %v282
    %v1109 = vunpack.c.h.b16 %v282
    %v1110 = vunpack.c.l.b16 %v283
    %v1111 = vunpack.c.h.b16 %v283
    %v1112 = vunpack.c.l.b16 %v284
    %v1113 = vunpack.c.h.b16 %v284
    %v1114 = vunpack.c.l.b16 %v285
    %v1115 = vunpack.c.h.b16 %v285
    %v1116 = vunpack.c.l.b16 %v286
    %v1117 = vunpack.c.h.b16 %v286
    %v1118 = vunpack.c.l.b16 %v287
    %v1119 = vunpack.c.h.b16 %v287
    %v1120 = vunpack.c.l.b16 %v288
    %v1121 = vunpack.c.h.b16 %v288
    %v1122 = vunpack.c.l.b16 %v289
    %v1123 = vunpack.c.h.b16 %v289
    %v1124 = vunpack.c.l.b16 %v290
    %v1125 = vunpack.c.h.b16 %v290
    %v1126 = vunpack.c.l.b16 %v291
    %v1127 = vunpack.c.h.b16 %v291
    %v1128 = vunpack.c.l.b16 %v292
    %v1129 = vunpack.c.h.b16 %v292
    %v1130 = vunpack.c.l.b16 %v293
    %v1131 = vunpack.c.h.b16 %v293
    %v1132 = vunpack.c.l.b16 %v294
    %v1133 = vunpack.c.h.b16 %v294
    %v1134 = vunpack.c.l.b16 %v295
    %v1135 = vunpack.c.h.b16 %v295
    %v1136 = vunpack.c.l.b16 %v296
    %v1137 = vunpack.c.h.b16 %v296
    %v1138 = vunpack.c.l.b16 %v297
    %v1139 = vunpack.c.h.b16 %v297
    %v1140 = vunpack.c.l.b16 %v298
    %v1141 = vunpack.c.h.b16 %v298
    %v1142 = vunpack.c.l.b16 %v299
    %v1143 = vunpack.c.h.b16 %v299
    %v1144 = vunpack.c.l.b16 %v300
    %v1145 = vunpack.c.h.b16 %v300
    %v1146 = vunpack.c.l.b16 %v301
    %v1147 = vunpack.c.h.b16 %v301
    %v1148 = vunpack.c.l.b16 %v302
    %v1149 = vunpack.c.h.b16 %v302
    %v1150 = vunpack.c.l.b16 %v303
    %v1151 = vunpack.c.h.b16 %v303
    %v1152 = vunpack.c.l.b16 %v304
    %v1153 = vunpack.c.h.b16 %v304
    %v1154 = vunpack.c.l.b16 %v305
    %v1155 = vunpack.c.h.b16 %v305
    %v1156 = vunpack.c.l.b16 %v306
    %v1157 = vunpack.c.h.b16 %v306
    %v1158 = vunpack.c.l.b16 %v307
    %v1159 = vunpack.c.h.b16 %v307
    %v1160 = vunpack.c.l.b16 %v308
    %v1161 = vunpack.c.h.b16 %v308
    %v1162 = vunpack.c.l.b16 %v309
    %v1163 = vunpack.c.h.b16 %v309
    %v1164 = vunpack.c.l.b16 %v310
    %v1165 = vunpack.c.h.b16 %v310
    %v1166 = vunpack.c.l.b16 %v311
    %v1167 = vunpack.c.h.b16 %v311
    %v1168 = vunpack.c.l.b16 %v312
    %v1169 = vunpack.c.h.b16 %v312
    %v1170 = vunpack.c.l.b16 %v313
    %v1171 = vunpack.c.h.b16 %v313
    %v1172 = vunpack.c.l.b16 %v314
    %v1173 = vunpack.c.h.b16 %v314
    %v1174 = vunpack.c.l.b16 %v315
    %v1175 = vunpack.c.h.b16 %v315
    %v1176 = vunpack.c.l.b16 %v316
    %v1177 = vunpack.c.h.b16 %v316
    %v1178 = vunpack.c.l.b16 %v317
    %v1179 = vunpack.c.h.b16 %v317
    %v1180 = vunpack.c.l.b16 %v318
    %v1181 = vunpack.c.h.b16 %v318
    %v1182 = vunpack.c.l.b16 %v319
    %v1183 = vunpack.c.h.b16 %v319
    %v1184 = vunpack.c.l.b16 %v320
    %v1185 = vunpack.c.h.b16 %v320
    %v1186 = vunpack.c.l.b16 %v321
    %v1187 = vunpack.c.h.b16 %v321
    %v1188 = vunpack.c.l.b16 %v322
    %v1189 = vunpack.c.h.b16 %v322
    %v1190 = vunpack.c.l.b16 %v323
    %v1191 = vunpack.c.h.b16 %v323
    %v1192 = vunpack.c.l.b16 %v324
    %v1193 = vunpack.c.h.b16 %v324
    %v1194 = vunpack.c.l.b16 %v325
    %v1195 = vunpack.c.h.b16 %v325
    %v1196 = vunpack.c.l.b16 %v326
    %v1197 = vunpack.c.h.b16 %v326
    %v1198 = vunpack.c.l.b16 %v327
    %v1199 = vunpack.c.h.b16 %v327
    %v1200 = vunpack.c.l.b16 %v328
    %v1201 = vunpack.c.h.b16 %v328
    %v1202 = vunpack.c.l.b16 %v329
    %v1203 = vunpack.c.h.b16 %v329
    %v1204 = vunpack.c.l.b16 %v330
    %v1205 = vunpack.c.h.b16 %v330
    %v1206 = vunpack.c.l.b16 %v331
    %v1207 = vunpack.c.h.b16 %v331
    %v1208 = vunpack.c.l.b16 %v332
    %v1209 = vunpack.c.h.b16 %v332
    %v1210 = vunpack.c.l.b16 %v333
    %v1211 = vunpack.c.h.b16 %v333
    %v1212 = vunpack.c.l.b16 %v334
    %v1213 = vunpack.c.h.b16 %v334
    %v1214 = vunpack.c.l.b16 %v335
    %v1215 = vunpack.c.h.b16 %v335
    %v1216 = vunpack.c.l.b16 %v336
    %v1217 = vunpack.c.h.b16 %v336
    %v1218 = vunpack.c.l.b16 %v337
    %v1219 = vunpack.c.h.b16 %v337
    %v1220 = vunpack.c.l.b16 %v338
    %v1221 = vunpack.c.h.b16 %v338
    %v1222 = vunpack.c.l.b16 %v339
    %v1223 = vunpack.c.h.b16 %v339
    %v1224 = vunpack.c.l.b16 %v340
    %v1225 = vunpack.c.h.b16 %v340
    %v1226 = vunpack.c.l.b16 %v341
    %v1227 = vunpack.c.h.b16 %v341
    %v1228 = vunpack.c.l.b16 %v342
    %v1229 = vunpack.c.h.b16 %v342
    %v1230 = vunpack.c.l.b16 %v343
    %v1231 = vunpack.c.h.b16 %v343
    %v1232 = vunpack.c.l.b16 %v344
    %v1233 = vunpack.c.h.b16 %v344
    %v1234 = vunpack.c.l.b16 %v345
    %v1235 = vunpack.c.h.b16 %v345
    %v1236 = vunpack.c.l.b16 %v346
    %v1237 = vunpack.c.h.b16 %v346
    %v1238 = vunpack.c.l.b16 %v347
    %v1239 = vunpack.c.h.b16 %v347
    %v1240 = vunpack.c.l.b16 %v348
    %v1241 = vunpack.c.h.b16 %v348
    %v1242 = vunpack.c.l.b16 %v349
    %v1243 = vunpack.c.h.b16 %v349
    %v1244 = vunpack.c.l.b16 %v350
    %v1245 = vunpack.c.h.b16 %v350
    %v1246 = vunpack.c.l.b16 %v351
    %v1247 = vunpack.c.h.b16 %v351
    %v1248 = vunpack.c.l.b16 %v352
    %v1249 = vunpack.c.h.b16 %v352
    %v1250 = vunpack.c.l.b16 %v353
    %v1251 = vunpack.c.h.b16 %v353
    %v1252 = vunpack.c.l.b16 %v354
    %v1253 = vunpack.c.h.b16 %v354
    %v1254 = vunpack.c.l.b16 %v355
    %v1255 = vunpack.c.h.b16 %v355
    %v1256 = vunpack.c.l.b16 %v356
    %v1257 = vunpack.c.h.b16 %v356
    %v1258 = vunpack.c.l.b16 %v357
    %v1259 = vunpack.c.h.b16 %v357
    %v1260 = vunpack.c.l.b16 %v358
    %v1261 = vunpack.c.h.b16 %v358
    %v1262 = vunpack.c.l.b16 %v359
    %v1263 = vunpack.c.h.b16 %v359
    %v1264 = vunpack.c.l.b16 %v360
    %v1265 = vunpack.c.h.b16 %v360
    %v1266 = vunpack.c.l.b16 %v361
    %v1267 = vunpack.c.h.b16 %v361
    %v1268 = vunpack.c.l.b16 %v362
    %v1269 = vunpack.c.h.b16 %v362
    %v1270 = vunpack.c.l.b16 %v363
    %v1271 = vunpack.c.h.b16 %v363
    %v1272 = vunpack.c.l.b16 %v364
    %v1273 = vunpack.c.h.b16 %v364
    %v1274 = vunpack.c.l.b16 %v365
    %v1275 = vunpack.c.h.b16 %v365
    %v1276 = vunpack.c.l.b16 %v366
    %v1277 = vunpack.c.h.b16 %v366
    %v1278 = vunpack.c.l.b16 %v367
    %v1279 = vunpack.c.h.b16 %v367
    %v1280 = vunpack.c.l.b16 %v368
    %v1281 = vunpack.c.h.b16 %v368
    %v1282 = vunpack.c.l.b16 %v369
    %v1283 = vunpack.c.h.b16 %v369
    %v1284 = vunpack.c.l.b16 %v370
    %v1285 = vunpack.c.h.b16 %v370
    %v1286 = vunpack.c.l.b16 %v371
    %v1287 = vunpack.c.h.b16 %v371
    %v1288 = vunpack.c.l.b16 %v372
    %v1289 = vunpack.c.h.b16 %v372
    %v1290 = vunpack.c.l.b16 %v373
    %v1291 = vunpack.c.h.b16 %v373
    %v1292 = vunpack.c.l.b16 %v374
    %v1293 = vunpack.c.h.b16 %v374
    %v1294 = vunpack.c.l.b16 %v375
    %v1295 = vunpack.c.h.b16 %v375
    %v1296 = vunpack.c.l.b16 %v376
    %v1297 = vunpack.c.h.b16 %v376
    %v1298 = vunpack.c.l.b16 %v377
    %v1299 = vunpack.c.h.b16 %v377
    %v1300 = vpack.c.b16 %v704, %v700
    %v1301 = vpack.c.b16 %v705, %v701
    %v1302 = vpack.c.b16 %v706, %v702
    %v1303 = vpack.c.b16 %v707, %v703
    %v1304 = vpack.c.b16 %v712, %v708
    %v1305 = vpack.c.b16 %v713, %v709
    %v1306 = vpack.c.b16 %v714, %v710
    %v1307 = vpack.c.b16 %v715, %v711
    %v1308 = vpack.c.b16 %v720, %v716
    %v1309 = vpack.c.b16 %v721, %v717
    %v1310 = vpack.c.b16 %v722, %v718
    %v1311 = vpack.c.b16 %v723, %v719
    %v1312 = vpack.c.b16 %v728, %v724
    %v1313 = vpack.c.b16 %v729, %v725
    %v1314 = vpack.c.b16 %v730, %v726
    %v1315 = vpack.c.b16 %v731, %v727
    %v1316 = vpack.c.b16 %v736, %v732
    %v1317 = vpack.c.b16 %v737, %v733
    %v1318 = vpack.c.b16 %v738, %v734
    %v1319 = vpack.c.b16 %v739, %v735
    %v1320 = vpack.c.b16 %v744, %v740
    %v1321 = vpack.c.b16 %v745, %v741
    %v1322 = vpack.c.b16 %v746, %v742
    %v1323 = vpack.c.b16 %v747, %v743
    %v1324 = vpack.c.b16 %v752, %v748
    %v1325 = vpack.c.b16 %v753, %v749
    %v1326 = vpack.c.b16 %v754, %v750
    %v1327 = vpack.c.b16 %v755, %v751
    %v1328 = vpack.c.b16 %v760, %v756
    %v1329 = vpack.c.b16 %v761, %v757
    %v1330 = vpack.c.b16 %v762, %v758
    %v1331 = vpack.c.b16 %v763, %v759
    %v1332 = vpack.c.b16 %v768, %v764
    %v1333 = vpack.c.b16 %v769, %v765
    %v1334 = vpack.c.b16 %v770, %v766
    %v1335 = vpack.c.b16 %v771, %v767
    %v1336 = vpack.c.b16 %v776, %v772
    %v1337 = vpack.c.b16 %v777, %v773
    %v1338 = vpack.c.b16 %v778, %v774
    %v1339 = vpack.c.b16 %v779, %v775
    %v1340 = vpack.c.b16 %v784, %v780
    %v1341 = vpack.c.b16 %v785, %v781
    %v1342 = vpack.c.b16 %v786, %v782
    %v1343 = vpack.c.b16 %v787, %v783
    %v1344 = vpack.c.b16 %v792, %v788
    %v1345 = vpack.c.b16 %v793, %v789
    %v1346 = vpack.c.b16 %v794, %v790
    %v1347 = vpack.c.b16 %v795, %v791
    %v1348 = vpack.c.b16 %v800, %v796
    %v1349 = vpack.c.b16 %v801, %v797
    %v1350 = vpack.c.b16 %v802, %v798
    %v1351 = vpack.c.b16 %v803, %v799
    %v1352 = vpack.c.b16 %v808, %v804
    %v1353 = vpack.c.b16 %v809, %v805
    %v1354 = vpack.c.b16 %v810, %v806
    %v1355 = vpack.c.b16 %v811, %v807
    %v1356 = vpack.c.b16 %v816, %v812
    %v1357 = vpack.c.b16 %v817, %v813
    %v1358 = vpack.c.b16 %v818, %v814
    %v1359 = vpack.c.b16 %v819, %v815
    %v1360 = vpack.c.b16 %v824, %v820
    %v1361 = vpack.c.b16 %v825, %v821
    %v1362 = vpack.c.b16 %v826, %v822
    %v1363 = vpack.c.b16 %v827, %v823
    %v1364 = vpack.c.b16 %v832, %v828
    %v1365 = vpack.c.b16 %v833, %v829
    %v1366 = vpack.c.b16 %v834, %v830
    %v1367 = vpack.c.b16 %v835, %v831
    %v1368 = vpack.c.b16 %v840, %v836
    %v1369 = vpack.c.b16 %v841, %v837
    %v1370 = vpack.c.b16 %v842, %v838
    %v1371 = vpack.c.b16 %v843, %v839
    %v1372 = vpack.c.b16 %v848, %v844
    %v1373 = vpack.c.b16 %v849, %v845
    %v1374 = vpack.c.b16 %v850, %v846
    %v1375 = vpack.c.b16 %v851, %v847
    %v1376 = vpack.c.b16 %v856, %v852
    %v1377 = vpack.c.b16 %v857, %v853
    %v1378 = vpack.c.b16 %v858, %v854
    %v1379 = vpack.c.b16 %v859, %v855
    %v1380 = vpack.c.b16 %v864, %v860
    %v1381 = vpack.c.b16 %v865, %v861
    %v1382 = vpack.c.b16 %v866, %v862
    %v1383 = vpack.c.b16 %v867, %v863
    %v1384 = vpack.c.b16 %v872, %v868
    %v1385 = vpack.c.b16 %v873, %v869
    %v1386 = vpack.c.b16 %v874, %v870
    %v1387 = vpack.c.b16 %v875, %v871
    %v1388 = vpack.c.b16 %v880, %v876
    %v1389 = vpack.c.b16 %v881, %v877
    %v1390 = vpack.c.b16 %v882, %v878
    %v1391 = vpack.c.b16 %v883, %v879
    %v1392 = vpack.c.b16 %v888, %v884
    %v1393 = vpack.c.b16 %v889, %v885
    %v1394 = vpack.c.b16 %v890, %v886
    %v1395 = vpack.c.b16 %v891, %v887
    %v1396 = vpack.c.b16 %v896, %v892
    %v1397 = vpack.c.b16 %v897, %v893
    %v1398 = vpack.c.b16 %v898, %v894
    %v1399 = vpack.c.b16 %v899, %v895
    %v1400 = vpack.c.b16 %v904, %v900
    %v1401 = vpack.c.b16 %v905, %v901
    %v1402 = vpack.c.b16 %v906, %v902
    %v1403 = vpack.c.b16 %v907, %v903
    %v1404 = vpack.c.b16 %v912, %v908
    %v1405 = vpack.c.b16 %v913, %v909
    %v1406 = vpack.c.b16 %v914, %v910
    %v1407 = vpack.c.b16 %v915, %v911
    %v1408 = vpack.c.b16 %v920, %v916
    %v1409 = vpack.c.b16 %v921, %v917
    %v1410 = vpack.c.b16 %v922, %v918
    %v1411 = vpack.c.b16 %v923, %v919
    %v1412 = vpack.c.b16 %v928, %v924
    %v1413 = vpack.c.b16 %v929, %v925
    %v1414 = vpack.c.b16 %v930, %v926
    %v1415 = vpack.c.b16 %v931, %v927
    %v1416 = vpack.c.b16 %v936, %v932
    %v1417 = vpack.c.b16 %v937, %v933
    %v1418 = vpack.c.b16 %v938, %v934
    %v1419 = vpack.c.b16 %v939, %v935
    %v1420 = vpack.c.b16 %v944, %v940
    %v1421 = vpack.c.b16 %v945, %v941
    %v1422 = vpack.c.b16 %v946, %v942
    %v1423 = vpack.c.b16 %v947, %v943
    %v1424 = vpack.c.b16 %v952, %v948
    %v1425 = vpack.c.b16 %v953, %v949
    %v1426 = vpack.c.b16 %v954, %v950
    %v1427 = vpack.c.b16 %v955, %v951
    %v1428 = vpack.c.b16 %v960, %v956
    %v1429 = vpack.c.b16 %v961, %v957
    %v1430 = vpack.c.b16 %v962, %v958
    %v1431 = vpack.c.b16 %v963, %v959
    %v1432 = vpack.c.b16 %v968, %v964
    %v1433 = vpack.c.b16 %v969, %v965
    %v1434 = vpack.c.b16 %v970, %v966
    %v1435 = vpack.c.b16 %v971, %v967
    %v1436 = vpack.c.b16 %v976, %v972
    %v1437 = vpack.c.b16 %v977, %v973
    %v1438 = vpack.c.b16 %v978, %v974
    %v1439 = vpack.c.b16 %v979, %v975
    %v1440 = vpack.c.b16 %v984, %v980
    %v1441 = vpack.c.b16 %v985, %v981
    %v1442 = vpack.c.b16 %v986, %v982
    %v1443 = vpack.c.b16 %v987, %v983
    %v1444 = vpack.c.b16 %v992, %v988
    %v1445 = vpack.c.b16 %v993, %v989
    %v1446 = vpack.c.b16 %v994, %v990
    %v1447 = vpack.c.b16 %v995, %v991
    %v1448 = vpack.c.b16 %v1000, %v996
    %v1449 = vpack.c.b16 %v1001, %v997
    %v1450 = vpack.c.b16 %v1002, %v998
    %v1451 = vpack.c.b16 %v1003, %v999
    %v1452 = vpack.c.b16 %v1008, %v1004
    %v1453 = vpack.c.b16 %v1009, %v1005
    %v1454 = vpack.c.b16 %v1010, %v1006
    %v1455 = vpack.c.b16 %v1011, %v1007
    %v1456 = vpack.c.b16 %v1016, %v1012
    %v1457 = vpack.c.b16 %v1017, %v1013
    %v1458 = vpack.c.b16 %v1018, %v1014
    %v1459 = vpack.c.b16 %v1019, %v1015
    %v1460 = vpack.c.b16 %v1024, %v1020
    %v1461 = vpack.c.b16 %v1025, %v1021
    %v1462 = vpack.c.b16 %v1026, %v1022
    %v1463 = vpack.c.b16 %v1027, %v1023
    %v1464 = vpack.c.b16 %v1032, %v1028
    %v1465 = vpack.c.b16 %v1033, %v1029
    %v1466 = vpack.c.b16 %v1034, %v1030
    %v1467 = vpack.c.b16 %v1035, %v1031
    %v1468 = vpack.c.b16 %v1040, %v1036
    %v1469 = vpack.c.b16 %v1041, %v1037
    %v1470 = vpack.c.b16 %v1042, %v1038
    %v1471 = vpack.c.b16 %v1043, %v1039
    %v1472 = vpack.c.b16 %v1048, %v1044
    %v1473 = vpack.c.b16 %v1049, %v1045
    %v1474 = vpack.c.b16 %v1050, %v1046
    %v1475 = vpack.c.b16 %v1051, %v1047
    %v1476 = vpack.c.b16 %v1056, %v1052
    %v1477 = vpack.c.b16 %v1057, %v1053
    %v1478 = vpack.c.b16 %v1058, %v1054
    %v1479 = vpack.c.b16 %v1059, %v1055
    %v1480 = vpack.c.b16 %v1064, %v1060
    %v1481 = vpack.c.b16 %v1065, %v1061
    %v1482 = vpack.c.b16 %v1066, %v1062
    %v1483 = vpack.c.b16 %v1067, %v1063
    %v1484 = vpack.c.b16 %v1072, %v1068
    %v1485 = vpack.c.b16 %v1073, %v1069
    %v1486 = vpack.c.b16 %v1074, %v1070
    %v1487 = vpack.c.b16 %v1075, %v1071
    %v1488 = vpack.c.b16 %v1080, %v1076
    %v1489 = vpack.c.b16 %v1081, %v1077
    %v1490 = vpack.c.b16 %v1082, %v1078
    %v1491 = vpack.c.b16 %v1083, %v1079
    %v1492 = vpack.c.b16 %v1088, %v1084
    %v1493 = vpack.c.b16 %v1089, %v1085
    %v1494 = vpack.c.b16 %v1090, %v1086
    %v1495 = vpack.c.b16 %v1091, %v1087
    %v1496 = vpack.c.b16 %v1096, %v1092
    %v1497 = vpack.c.b16 %v1097, %v1093
    %v1498 = vpack.c.b16 %v1098, %v1094
    %v1499 = vpack.c.b16 %v1099, %v1095
    %v1500 = vpack.c.b16 %v1104, %v1100
    %v1501 = vpack.c.b16 %v1105, %v1101
    %v1502 = vpack.c.b16 %v1106, %v1102
    %v1503 = vpack.c.b16 %v1107, %v1103
    %v1504 = vpack.c.b16 %v1112, %v1108
    %v1505 = vpack.c.b16 %v1113, %v1109
    %v1506 = vpack.c.b16 %v1114, %v1110
    %v1507 = vpack.c.b16 %v1115, %v1111
    %v1508 = vpack.c.b16 %v1120, %v1116
    %v1509 = vpack.c.b16 %v1121, %v1117
    %v1510 = vpack.c.b16 %v1122, %v1118
    %v1511 = vpack.c.b16 %v1123, %v1119
    %v1512 = vpack.c.b16 %v1128, %v1124
    %v1513 = vpack.c.b16 %v1129, %v1125
    %v1514 = vpack.c.b16 %v1130, %v1126
    %v1515 = vpack.c.b16 %v1131, %v1127
    %v1516 = vpack.c.b16 %v1136, %v1132
    %v1517 = vpack.c.b16 %v1137, %v1133
    %v1518 = vpack.c.b16 %v1138, %v1134
    %v1519 = vpack.c.b16 %v1139, %v1135
    %v1520 = vpack.c.b16 %v1144, %v1140
    %v1521 = vpack.c.b16 %v1145, %v1141
    %v1522 = vpack.c.b16 %v1146, %v1142
    %v1523 = vpack.c.b16 %v1147, %v1143
    %v1524 = vpack.c.b16 %v1152, %v1148
    %v1525 = vpack.c.b16 %v1153, %v1149
    %v1526 = vpack.c.b16 %v1154, %v1150
    %v1527 = vpack.c.b16 %v1155, %v1151
    %v1528 = vpack.c.b16 %v1160, %v1156
    %v1529 = vpack.c.b16 %v1161, %v1157
    %v1530 = vpack.c.b16 %v1162, %v1158
    %v1531 = vpack.c.b16 %v1163, %v1159
    %v1532 = vpack.c.b16 %v1168, %v1164
    %v1533 = vpack.c.b16 %v1169, %v1165
    %v1534 = vpack.c.b16 %v1170, %v1166
    %v1535 = vpack.c.b16 %v1171, %v1167
    %v1536 = vpack.c.b16 %v1176, %v1172
    %v1537 = vpack.c.b16 %v1177, %v1173
    %v1538 = vpack.c.b16 %v1178, %v1174
    %v1539 = vpack.c.b16 %v1179, %v1175
    %v1540 = vpack.c.b16 %v1184, %v1180
    %v1541 = vpack.c.b16 %v1185, %v1181
    %v1542 = vpack.c.b16 %v1186, %v1182
    %v1543 = vpack.c.b16 %v1187, %v1183
    %v1544 = vpack.c.b16 %v1192, %v1188
    %v1545 = vpack.c.b16 %v1193, %v1189
    %v1546 = vpack.c.b16 %v1194, %v1190
    %v1547 = vpack.c.b16 %v1195, %v1191
    %v1548 = vpack.c.b16 %v1200, %v1196
    %v1549 = vpack.c.b16 %v1201, %v1197
    %v1550 = vpack.c.b16 %v1202, %v1198
    %v1551 = vpack.c.b16 %v1203, %v1199
    %v1552 = vpack.c.b16 %v1208, %v1204
    %v1553 = vpack.c.b16 %v1209, %v1205
    %v1554 = vpack.c.b16 %v1210, %v1206
    %v1555 = vpack.c.b16 %v1211, %v1207
    %v1556 = vpack.c.b16 %v1216, %v1212
    %v1557 = vpack.c.b16 %v1217, %v1213
    %v1558 = vpack.c.b16 %v1218, %v1214
    %v1559 = vpack.c.b16 %v1219, %v1215
    %v1560 = vpack.c.b16 %v1224, %v1220
    %v1561 = vpack.c.b16 %v1225, %v1221
    %v1562 = vpack.c.b16 %v1226, %v1222
    %v1563 = vpack.c.b16 %v1227, %v1223
    %v1564 = vpack.c.b16 %v1232, %v1228
    %v1565 = vpack.c.b16 %v1233, %v1229
    %v1566 = vpack.c.b16 %v1234, %v1230
    %v1567 = vpack.c.b16 %v1235, %v1231
    %v1568 = vpack.c.b16 %v1240, %v1236
    %v1569 = vpack.c.b16 %v1241, %v1237
    %v1570 = vpack.c.b16 %v1242, %v1238
    %v1571 = vpack.c.b16 %v1243, %v1239
    %v1572 = vpack.c.b16 %v1248, %v1244
    %v1573 = vpack.c.b16 %v1249, %v1245
    %v1574 = vpack.c.b16 %v1250, %v1246
    %v1575 = vpack.c.b16 %v1251, %v1247
    %v1576 = vpack.c.b16 %v1256, %v1252
    %v1577 = vpack.c.b16 %v1257, %v1253
    %v1578 = vpack.c.b16 %v1258, %v1254
    %v1579 = vpack.c.b16 %v1259, %v1255
    %v1580 = vpack.c.b16 %v1264, %v1260
    %v1581 = vpack.c.b16 %v1265, %v1261
    %v1582 = vpack.c.b16 %v1266, %v1262
    %v1583 = vpack.c.b16 %v1267, %v1263
    %v1584 = vpack.c.b16 %v1272, %v1268
    %v1585 = vpack.c.b16 %v1273, %v1269
    %v1586 = vpack.c.b16 %v1274, %v1270
    %v1587 = vpack.c.b16 %v1275, %v1271
    %v1588 = vpack.c.b16 %v1280, %v1276
    %v1589 = vpack.c.b16 %v1281, %v1277
    %v1590 = vpack.c.b16 %v1282, %v1278
    %v1591 = vpack.c.b16 %v1283, %v1279
    %v1592 = vpack.c.b16 %v1288, %v1284
    %v1593 = vpack.c.b16 %v1289, %v1285
    %v1594 = vpack.c.b16 %v1290, %v1286
    %v1595 = vpack.c.b16 %v1291, %v1287
    %v1596 = vpack.c.b16 %v1296, %v1292
    %v1597 = vpack.c.b16 %v1297, %v1293
    %v1598 = vpack.c.b16 %v1298, %v1294
    %v1599 = vpack.c.b16 %v1299, %v1295
    %vm1900 = vcmask 392192
    %v1902 = vsel %vm1900, %v77, 0
    %1904 = vmatprep.subr.bf16.mxu0 %v1301
    %1905 = vmatpush1.bf16.msra.mxu0 %v1300
    %1906 = vmatprep.subr.bf16.mxu0 %v1305
    %1907 = vmatpush1.bf16.msra.mxu0 %v1304
    %1908 = vmatprep.subr.bf16.mxu0 %v1309
    %1909 = vmatpush1.bf16.msra.mxu0 %v1308
    %1910 = vmatprep.subr.bf16.mxu0 %v1313
    %1911 = vmatpush1.bf16.msra.mxu0 %v1312
    %1912 = vmatprep.subr.bf16.mxu0 %v1317
    %1913 = vmatpush1.bf16.msra.mxu0 %v1316
    %1914 = vmatprep.subr.bf16.mxu0 %v1321
    %1915 = vmatpush1.bf16.msra.mxu0 %v1320
    %1916 = vmatprep.subr.bf16.mxu0 %v1325
    %1917 = vmatpush1.bf16.msra.mxu0 %v1324
    %1918 = vmatprep.subr.bf16.mxu0 %v1329
    %1919 = vmatpush1.bf16.msra.mxu0 %v1328
    %1920 = vmatprep.subr.bf16.mxu0 %v1333
    %1921 = vmatpush1.bf16.msra.mxu0 %v1332
    %1922 = vmatprep.subr.bf16.mxu0 %v1337
    %1923 = vmatpush1.bf16.msra.mxu0 %v1336
    %1924 = vmatprep.subr.bf16.mxu0 %v1341
    %1925 = vmatpush1.bf16.msra.mxu0 %v1340
    %1926 = vmatprep.subr.bf16.mxu0 %v1345
    %1927 = vmatpush1.bf16.msra.mxu0 %v1344
    %1928 = vmatprep.subr.bf16.mxu0 %v1349
    %1929 = vmatpush1.bf16.msra.mxu0 %v1348
    %1930 = vmatprep.subr.bf16.mxu0 %v1353
    %1931 = vmatpush1.bf16.msra.mxu0 %v1352
    %1932 = vmatprep.subr.bf16.mxu0 %v1357
    %1933 = vmatpush1.bf16.msra.mxu0 %v1356
    %1934 = vmatprep.subr.bf16.mxu0 %v1361
    %1935 = vmatpush1.bf16.msra.mxu0 %v1360
    %1936 = vmatprep.mubr.bf16.mxu0 %v69
    %1937 = vmatmul.mubr.bf16.gmra.mrb[0].mxu0 %v68
    %v1938 = vpop.f32.mrb[0].mxu0
    %v1939 = vadd.f32 %v383, %v1938
    %v1940 = vpop.f32.mrb[0].mxu0
    %v1941 = vadd.f32 %v387, %v1940
    %v1942 = vpop.f32.mrb[0].mxu0
    %v1943 = vpop.f32.mrb[0].mxu0
    %1944 = vdwg.mxu0
    %1945 = vmatprep.subr.bf16.mxu0 %v1365
    %1946 = vmatpush1.bf16.msra.mxu0 %v1364
    %1947 = vmatprep.subr.bf16.mxu0 %v1369
    %1948 = vmatpush1.bf16.msra.mxu0 %v1368
    %1949 = vmatprep.subr.bf16.mxu0 %v1373
    %1950 = vmatpush1.bf16.msra.mxu0 %v1372
    %1951 = vmatprep.subr.bf16.mxu0 %v1377
    %1952 = vmatpush1.bf16.msra.mxu0 %v1376
    %1953 = vmatprep.subr.bf16.mxu0 %v1381
    %1954 = vmatpush1.bf16.msra.mxu0 %v1380
    %1955 = vmatprep.subr.bf16.mxu0 %v1385
    %1956 = vmatpush1.bf16.msra.mxu0 %v1384
    %1957 = vmatprep.subr.bf16.mxu0 %v1389
    %1958 = vmatpush1.bf16.msra.mxu0 %v1388
    %1959 = vmatprep.subr.bf16.mxu0 %v1393
    %1960 = vmatpush1.bf16.msra.mxu0 %v1392
    %1961 = vmatprep.subr.bf16.mxu0 %v1397
    %1962 = vmatpush1.bf16.msra.mxu0 %v1396
    %1963 = vmatprep.subr.bf16.mxu0 %v1401
    %1964 = vmatpush1.bf16.msra.mxu0 %v1400
    %1965 = vmatprep.subr.bf16.mxu0 %v1405
    %1966 = vmatpush1.bf16.msra.mxu0 %v1404
    %1967 = vmatprep.subr.bf16.mxu0 %v1409
    %1968 = vmatpush1.bf16.msra.mxu0 %v1408
    %1969 = vmatprep.subr.bf16.mxu0 %v1413
    %1970 = vmatpush1.bf16.msra.mxu0 %v1412
    %1971 = vmatprep.subr.bf16.mxu0 %v1417
    %1972 = vmatpush1.bf16.msra.mxu0 %v1416
    %1973 = vmatprep.subr.bf16.mxu0 %v1421
    %1974 = vmatpush1.bf16.msra.mxu0 %v1420
    %1975 = vmatprep.subr.bf16.mxu0 %v1425
    %1976 = vmatpush1.bf16.msra.mxu0 %v1424
    %1977 = vmatprep.mubr.bf16.mxu0 %v71
    %1978 = vmatmul.mubr.bf16.gmra.mrb[0].mxu0 %v70
    %v1979 = vpop.f32.mrb[0].mxu0
    %v1980 = vadd.f32 %v1939, %v1979
    %v1981 = vpop.f32.mrb[0].mxu0
    %v1982 = vadd.f32 %v1941, %v1981
    %v1983 = vpop.f32.mrb[0].mxu0
    %v1984 = vpop.f32.mrb[0].mxu0
    %1985 = vdwg.mxu0
    %1986 = vmatprep.subr.bf16.mxu0 %v1429
    %1987 = vmatpush1.bf16.msra.mxu0 %v1428
    %1988 = vmatprep.subr.bf16.mxu0 %v1433
    %1989 = vmatpush1.bf16.msra.mxu0 %v1432
    %1990 = vmatprep.subr.bf16.mxu0 %v1437
    %1991 = vmatpush1.bf16.msra.mxu0 %v1436
    %1992 = vmatprep.subr.bf16.mxu0 %v1441
    %1993 = vmatpush1.bf16.msra.mxu0 %v1440
    %1994 = vmatprep.subr.bf16.mxu0 %v1445
    %1995 = vmatpush1.bf16.msra.mxu0 %v1444
    %1996 = vmatprep.subr.bf16.mxu0 %v1449
    %1997 = vmatpush1.bf16.msra.mxu0 %v1448
    %1998 = vmatprep.subr.bf16.mxu0 %v1453
    %1999 = vmatpush1.bf16.msra.mxu0 %v1452
    %2000 = vmatprep.subr.bf16.mxu0 %v1457
    %2001 = vmatpush1.bf16.msra.mxu0 %v1456
    %2002 = vmatprep.subr.bf16.mxu0 %v1461
    %2003 = vmatpush1.bf16.msra.mxu0 %v1460
    %2004 = vmatprep.subr.bf16.mxu0 %v1465
    %2005 = vmatpush1.bf16.msra.mxu0 %v1464
    %2006 = vmatprep.subr.bf16.mxu0 %v1469
    %2007 = vmatpush1.bf16.msra.mxu0 %v1468
    %2008 = vmatprep.subr.bf16.mxu0 %v1473
    %2009 = vmatpush1.bf16.msra.mxu0 %v1472
    %2010 = vmatprep.subr.bf16.mxu0 %v1477
    %2011 = vmatpush1.bf16.msra.mxu0 %v1476
    %2012 = vmatprep.subr.bf16.mxu0 %v1481
    %2013 = vmatpush1.bf16.msra.mxu0 %v1480
    %2014 = vmatprep.subr.bf16.mxu0 %v1485
    %2015 = vmatpush1.bf16.msra.mxu0 %v1484
    %2016 = vmatprep.subr.bf16.mxu0 %v1489
    %2017 = vmatpush1.bf16.msra.mxu0 %v1488
    %2018 = vmatprep.mubr.bf16.mxu0 %v73
    %2019 = vmatmul.mubr.bf16.gmra.mrb[0].mxu0 %v72
    %v2020 = vpop.f32.mrb[0].mxu0
    %v2021 = vadd.f32 %v1980, %v2020
    %v2022 = vpop.f32.mrb[0].mxu0
    %v2023 = vadd.f32 %v1982, %v2022
    %v2024 = vpop.f32.mrb[0].mxu0
    %v2025 = vpop.f32.mrb[0].mxu0
    %2026 = vdwg.mxu0
    %2027 = vmatprep.subr.bf16.mxu0 %v1493
    %2028 = vmatpush1.bf16.msra.mxu0 %v1492
    %2029 = vmatprep.subr.bf16.mxu0 %v1497
    %2030 = vmatpush1.bf16.msra.mxu0 %v1496
    %2031 = vmatprep.subr.bf16.mxu0 %v1501
    %2032 = vmatpush1.bf16.msra.mxu0 %v1500
    %2033 = vmatprep.subr.bf16.mxu0 %v1505
    %2034 = vmatpush1.bf16.msra.mxu0 %v1504
    %2035 = vmatprep.subr.bf16.mxu0 %v1509
    %2036 = vmatpush1.bf16.msra.mxu0 %v1508
    %2037 = vmatprep.subr.bf16.mxu0 %v1513
    %2038 = vmatpush1.bf16.msra.mxu0 %v1512
    %2039 = vmatprep.subr.bf16.mxu0 %v1517
    %2040 = vmatpush1.bf16.msra.mxu0 %v1516
    %2041 = vmatprep.subr.bf16.mxu0 %v1521
    %2042 = vmatpush1.bf16.msra.mxu0 %v1520
    %2043 = vmatprep.subr.bf16.mxu0 %v1525
    %2044 = vmatpush1.bf16.msra.mxu0 %v1524
    %2045 = vmatprep.subr.bf16.mxu0 %v1529
    %2046 = vmatpush1.bf16.msra.mxu0 %v1528
    %2047 = vmatprep.subr.bf16.mxu0 %v1533
    %2048 = vmatpush1.bf16.msra.mxu0 %v1532
    %2049 = vmatprep.subr.bf16.mxu0 %v1537
    %2050 = vmatpush1.bf16.msra.mxu0 %v1536
    %2051 = vmatprep.subr.bf16.mxu0 %v1541
    %2052 = vmatpush1.bf16.msra.mxu0 %v1540
    %2053 = vmatprep.subr.bf16.mxu0 %v1545
    %2054 = vmatpush1.bf16.msra.mxu0 %v1544
    %2055 = vmatprep.subr.bf16.mxu0 %v1549
    %2056 = vmatpush1.bf16.msra.mxu0 %v1548
    %2057 = vmatprep.subr.bf16.mxu0 %v1553
    %2058 = vmatpush1.bf16.msra.mxu0 %v1552
    %2059 = vmatprep.mubr.bf16.mxu0 %v75
    %2060 = vmatmul.mubr.bf16.gmra.mrb[0].mxu0 %v74
    %v2061 = vpop.f32.mrb[0].mxu0
    %v2062 = vadd.f32 %v2021, %v2061
    %v2063 = vpop.f32.mrb[0].mxu0
    %v2064 = vadd.f32 %v2023, %v2063
    %v2065 = vpop.f32.mrb[0].mxu0
    %v2066 = vpop.f32.mrb[0].mxu0
    %2067 = vdwg.mxu0
    %2068 = vmatprep.subr.bf16.mxu0 %v1557
    %2069 = vmatpush1.bf16.msra.mxu0 %v1556
    %2070 = vmatprep.subr.bf16.mxu0 %v1561
    %2071 = vmatpush1.bf16.msra.mxu0 %v1560
    %2072 = vmatprep.subr.bf16.mxu0 %v1565
    %2073 = vmatpush1.bf16.msra.mxu0 %v1564
    %2074 = vmatprep.subr.bf16.mxu0 %v1569
    %2075 = vmatpush1.bf16.msra.mxu0 %v1568
    %2076 = vmatprep.subr.bf16.mxu0 %v1573
    %2077 = vmatpush1.bf16.msra.mxu0 %v1572
    %2078 = vmatprep.subr.bf16.mxu0 %v1577
    %2079 = vmatpush1.bf16.msra.mxu0 %v1576
    %2080 = vmatprep.subr.bf16.mxu0 %v1581
    %2081 = vmatpush1.bf16.msra.mxu0 %v1580
    %2082 = vmatprep.subr.bf16.mxu0 %v1585
    %2083 = vmatpush1.bf16.msra.mxu0 %v1584
    %2084 = vmatprep.subr.bf16.mxu0 %v1589
    %2085 = vmatpush1.bf16.msra.mxu0 %v1588
    %2086 = vmatprep.subr.bf16.mxu0 %v1593
    %2087 = vmatpush1.bf16.msra.mxu0 %v1592
    %2088 = vmatprep.subr.bf16.mxu0 %v1597
    %2089 = vmatpush1.bf16.msra.mxu0 %v1596
    %2090 = vmatprep.subr.bf16.mxu0 0
    %2091 = vmatpush1.bf16.msra.mxu0 0
    %2092 = vmatprep.subr.bf16.mxu0 0
    %2093 = vmatpush1.bf16.msra.mxu0 0
    %2094 = vmatprep.subr.bf16.mxu0 0
    %2095 = vmatpush1.bf16.msra.mxu0 0
    %2096 = vmatprep.subr.bf16.mxu0 0
    %2097 = vmatpush1.bf16.msra.mxu0 0
    %2098 = vmatprep.subr.bf16.mxu0 0
    %2099 = vmatpush1.bf16.msra.mxu0 0
    %2100 = vmatprep.mubr.bf16.mxu0 %v1902
    %2101 = vmatmul.mubr.bf16.gmra.mrb[0].mxu0 %v76
    %v2102 = vpop.f32.mrb[0].mxu0
    %v2103 = vadd.f32 %v2062, %v2102
    %v2104 = vpop.f32.mrb[0].mxu0
    %v2105 = vadd.f32 %v2064, %v2104
    %v2106 = vpop.f32.mrb[0].mxu0
    %v2107 = vpop.f32.mrb[0].mxu0
    %2108 = vdwg.mxu0
    %2109 = vmatprep.subr.bf16.mxu0 %v1303
    %2110 = vmatpush1.bf16.msra.mxu0 %v1302
    %2111 = vmatprep.subr.bf16.mxu0 %v1307
    %2112 = vmatpush1.bf16.msra.mxu0 %v1306
    %2113 = vmatprep.subr.bf16.mxu0 %v1311
    %2114 = vmatpush1.bf16.msra.mxu0 %v1310
    %2115 = vmatprep.subr.bf16.mxu0 %v1315
    %2116 = vmatpush1.bf16.msra.mxu0 %v1314
    %2117 = vmatprep.subr.bf16.mxu0 %v1319
    %2118 = vmatpush1.bf16.msra.mxu0 %v1318
    %2119 = vmatprep.subr.bf16.mxu0 %v1323
    %2120 = vmatpush1.bf16.msra.mxu0 %v1322
    %2121 = vmatprep.subr.bf16.mxu0 %v1327
    %2122 = vmatpush1.bf16.msra.mxu0 %v1326
    %2123 = vmatprep.subr.bf16.mxu0 %v1331
    %2124 = vmatpush1.bf16.msra.mxu0 %v1330
    %2125 = vmatprep.subr.bf16.mxu0 %v1335
    %2126 = vmatpush1.bf16.msra.mxu0 %v1334
    %2127 = vmatprep.subr.bf16.mxu0 %v1339
    %2128 = vmatpush1.bf16.msra.mxu0 %v1338
    %2129 = vmatprep.subr.bf16.mxu0 %v1343
    %2130 = vmatpush1.bf16.msra.mxu0 %v1342
    %2131 = vmatprep.subr.bf16.mxu0 %v1347
    %2132 = vmatpush1.bf16.msra.mxu0 %v1346
    %2133 = vmatprep.subr.bf16.mxu0 %v1351
    %2134 = vmatpush1.bf16.msra.mxu0 %v1350
    %2135 = vmatprep.subr.bf16.mxu0 %v1355
    %2136 = vmatpush1.bf16.msra.mxu0 %v1354
    %2137 = vmatprep.subr.bf16.mxu0 %v1359
    %2138 = vmatpush1.bf16.msra.mxu0 %v1358
    %2139 = vmatprep.subr.bf16.mxu0 %v1363
    %2140 = vmatpush1.bf16.msra.mxu0 %v1362
    %2141 = vmatprep.mubr.bf16.mxu0 %v69
    %2142 = vmatmul.mubr.bf16.gmra.mrb[0].mxu0 %v68
    %v2143 = vpop.f32.mrb[0].mxu0
    %v2144 = vadd.f32 %v391, %v2143
    %v2145 = vpop.f32.mrb[0].mxu0
    %v2146 = vadd.f32 %v395, %v2145
    %v2147 = vpop.f32.mrb[0].mxu0
    %v2148 = vpop.f32.mrb[0].mxu0
    %2149 = vdwg.mxu0
    %2150 = vmatprep.subr.bf16.mxu0 %v1367
    %2151 = vmatpush1.bf16.msra.mxu0 %v1366
    %2152 = vmatprep.subr.bf16.mxu0 %v1371
    %2153 = vmatpush1.bf16.msra.mxu0 %v1370
    %2154 = vmatprep.subr.bf16.mxu0 %v1375
    %2155 = vmatpush1.bf16.msra.mxu0 %v1374
    %2156 = vmatprep.subr.bf16.mxu0 %v1379
    %2157 = vmatpush1.bf16.msra.mxu0 %v1378
    %2158 = vmatprep.subr.bf16.mxu0 %v1383
    %2159 = vmatpush1.bf16.msra.mxu0 %v1382
    %2160 = vmatprep.subr.bf16.mxu0 %v1387
    %2161 = vmatpush1.bf16.msra.mxu0 %v1386
    %2162 = vmatprep.subr.bf16.mxu0 %v1391
    %2163 = vmatpush1.bf16.msra.mxu0 %v1390
    %2164 = vmatprep.subr.bf16.mxu0 %v1395
    %2165 = vmatpush1.bf16.msra.mxu0 %v1394
    %2166 = vmatprep.subr.bf16.mxu0 %v1399
    %2167 = vmatpush1.bf16.msra.mxu0 %v1398
    %2168 = vmatprep.subr.bf16.mxu0 %v1403
    %2169 = vmatpush1.bf16.msra.mxu0 %v1402
    %2170 = vmatprep.subr.bf16.mxu0 %v1407
    %2171 = vmatpush1.bf16.msra.mxu0 %v1406
    %2172 = vmatprep.subr.bf16.mxu0 %v1411
    %2173 = vmatpush1.bf16.msra.mxu0 %v1410
    %2174 = vmatprep.subr.bf16.mxu0 %v1415
    %2175 = vmatpush1.bf16.msra.mxu0 %v1414
    %2176 = vmatprep.subr.bf16.mxu0 %v1419
    %2177 = vmatpush1.bf16.msra.mxu0 %v1418
    %2178 = vmatprep.subr.bf16.mxu0 %v1423
    %2179 = vmatpush1.bf16.msra.mxu0 %v1422
    %2180 = vmatprep.subr.bf16.mxu0 %v1427
    %2181 = vmatpush1.bf16.msra.mxu0 %v1426
    %2182 = vmatprep.mubr.bf16.mxu0 %v71
    %2183 = vmatmul.mubr.bf16.gmra.mrb[0].mxu0 %v70
    %v2184 = vpop.f32.mrb[0].mxu0
    %v2185 = vadd.f32 %v2144, %v2184
    %v2186 = vpop.f32.mrb[0].mxu0
    %v2187 = vadd.f32 %v2146, %v2186
    %v2188 = vpop.f32.mrb[0].mxu0
    %v2189 = vpop.f32.mrb[0].mxu0
    %2190 = vdwg.mxu0
    %2191 = vmatprep.subr.bf16.mxu0 %v1431
    %2192 = vmatpush1.bf16.msra.mxu0 %v1430
    %2193 = vmatprep.subr.bf16.mxu0 %v1435
    %2194 = vmatpush1.bf16.msra.mxu0 %v1434
    %2195 = vmatprep.subr.bf16.mxu0 %v1439
    %2196 = vmatpush1.bf16.msra.mxu0 %v1438
    %2197 = vmatprep.subr.bf16.mxu0 %v1443
    %2198 = vmatpush1.bf16.msra.mxu0 %v1442
    %2199 = vmatprep.subr.bf16.mxu0 %v1447
    %2200 = vmatpush1.bf16.msra.mxu0 %v1446
    %2201 = vmatprep.subr.bf16.mxu0 %v1451
    %2202 = vmatpush1.bf16.msra.mxu0 %v1450
    %2203 = vmatprep.subr.bf16.mxu0 %v1455
    %2204 = vmatpush1.bf16.msra.mxu0 %v1454
    %2205 = vmatprep.subr.bf16.mxu0 %v1459
    %2206 = vmatpush1.bf16.msra.mxu0 %v1458
    %2207 = vmatprep.subr.bf16.mxu0 %v1463
    %2208 = vmatpush1.bf16.msra.mxu0 %v1462
    %2209 = vmatprep.subr.bf16.mxu0 %v1467
    %2210 = vmatpush1.bf16.msra.mxu0 %v1466
    %2211 = vmatprep.subr.bf16.mxu0 %v1471
    %2212 = vmatpush1.bf16.msra.mxu0 %v1470
    %2213 = vmatprep.subr.bf16.mxu0 %v1475
    %2214 = vmatpush1.bf16.msra.mxu0 %v1474
    %2215 = vmatprep.subr.bf16.mxu0 %v1479
    %2216 = vmatpush1.bf16.msra.mxu0 %v1478
    %2217 = vmatprep.subr.bf16.mxu0 %v1483
    %2218 = vmatpush1.bf16.msra.mxu0 %v1482
    %2219 = vmatprep.subr.bf16.mxu0 %v1487
    %2220 = vmatpush1.bf16.msra.mxu0 %v1486
    %2221 = vmatprep.subr.bf16.mxu0 %v1491
    %2222 = vmatpush1.bf16.msra.mxu0 %v1490
    %2223 = vmatprep.mubr.bf16.mxu0 %v73
    %2224 = vmatmul.mubr.bf16.gmra.mrb[0].mxu0 %v72
    %v2225 = vpop.f32.mrb[0].mxu0
    %v2226 = vadd.f32 %v2185, %v2225
    %v2227 = vpop.f32.mrb[0].mxu0
    %v2228 = vadd.f32 %v2187, %v2227
    %v2229 = vpop.f32.mrb[0].mxu0
    %v2230 = vpop.f32.mrb[0].mxu0
    %2231 = vdwg.mxu0
    %2232 = vmatprep.subr.bf16.mxu0 %v1495
    %2233 = vmatpush1.bf16.msra.mxu0 %v1494
    %2234 = vmatprep.subr.bf16.mxu0 %v1499
    %2235 = vmatpush1.bf16.msra.mxu0 %v1498
    %2236 = vmatprep.subr.bf16.mxu0 %v1503
    %2237 = vmatpush1.bf16.msra.mxu0 %v1502
    %2238 = vmatprep.subr.bf16.mxu0 %v1507
    %2239 = vmatpush1.bf16.msra.mxu0 %v1506
    %2240 = vmatprep.subr.bf16.mxu0 %v1511
    %2241 = vmatpush1.bf16.msra.mxu0 %v1510
    %2242 = vmatprep.subr.bf16.mxu0 %v1515
    %2243 = vmatpush1.bf16.msra.mxu0 %v1514
    %2244 = vmatprep.subr.bf16.mxu0 %v1519
    %2245 = vmatpush1.bf16.msra.mxu0 %v1518
    %2246 = vmatprep.subr.bf16.mxu0 %v1523
    %2247 = vmatpush1.bf16.msra.mxu0 %v1522
    %2248 = vmatprep.subr.bf16.mxu0 %v1527
    %2249 = vmatpush1.bf16.msra.mxu0 %v1526
    %2250 = vmatprep.subr.bf16.mxu0 %v1531
    %2251 = vmatpush1.bf16.msra.mxu0 %v1530
    %2252 = vmatprep.subr.bf16.mxu0 %v1535
    %2253 = vmatpush1.bf16.msra.mxu0 %v1534
    %2254 = vmatprep.subr.bf16.mxu0 %v1539
    %2255 = vmatpush1.bf16.msra.mxu0 %v1538
    %2256 = vmatprep.subr.bf16.mxu0 %v1543
    %2257 = vmatpush1.bf16.msra.mxu0 %v1542
    %2258 = vmatprep.subr.bf16.mxu0 %v1547
    %2259 = vmatpush1.bf16.msra.mxu0 %v1546
    %2260 = vmatprep.subr.bf16.mxu0 %v1551
    %2261 = vmatpush1.bf16.msra.mxu0 %v1550
    %2262 = vmatprep.subr.bf16.mxu0 %v1555
    %2263 = vmatpush1.bf16.msra.mxu0 %v1554
    %2264 = vmatprep.mubr.bf16.mxu0 %v75
    %2265 = vmatmul.mubr.bf16.gmra.mrb[0].mxu0 %v74
    %v2266 = vpop.f32.mrb[0].mxu0
    %v2267 = vadd.f32 %v2226, %v2266
    %v2268 = vpop.f32.mrb[0].mxu0
    %v2269 = vadd.f32 %v2228, %v2268
    %v2270 = vpop.f32.mrb[0].mxu0
    %v2271 = vpop.f32.mrb[0].mxu0
    %2272 = vdwg.mxu0
    %2273 = vmatprep.subr.bf16.mxu0 %v1559
    %2274 = vmatpush1.bf16.msra.mxu0 %v1558
    %2275 = vmatprep.subr.bf16.mxu0 %v1563
    %2276 = vmatpush1.bf16.msra.mxu0 %v1562
    %2277 = vmatprep.subr.bf16.mxu0 %v1567
    %2278 = vmatpush1.bf16.msra.mxu0 %v1566
    %2279 = vmatprep.subr.bf16.mxu0 %v1571
    %2280 = vmatpush1.bf16.msra.mxu0 %v1570
    %2281 = vmatprep.subr.bf16.mxu0 %v1575
    %2282 = vmatpush1.bf16.msra.mxu0 %v1574
    %2283 = vmatprep.subr.bf16.mxu0 %v1579
    %2284 = vmatpush1.bf16.msra.mxu0 %v1578
    %2285 = vmatprep.subr.bf16.mxu0 %v1583
    %2286 = vmatpush1.bf16.msra.mxu0 %v1582
    %2287 = vmatprep.subr.bf16.mxu0 %v1587
    %2288 = vmatpush1.bf16.msra.mxu0 %v1586
    %2289 = vmatprep.subr.bf16.mxu0 %v1591
    %2290 = vmatpush1.bf16.msra.mxu0 %v1590
    %2291 = vmatprep.subr.bf16.mxu0 %v1595
    %2292 = vmatpush1.bf16.msra.mxu0 %v1594
    %2293 = vmatprep.subr.bf16.mxu0 %v1599
    %2294 = vmatpush1.bf16.msra.mxu0 %v1598
    %2295 = vmatprep.subr.bf16.mxu0 0
    %2296 = vmatpush1.bf16.msra.mxu0 0
    %2297 = vmatprep.subr.bf16.mxu0 0
    %2298 = vmatpush1.bf16.msra.mxu0 0
    %2299 = vmatprep.subr.bf16.mxu0 0
    %2300 = vmatpush1.bf16.msra.mxu0 0
    %2301 = vmatprep.subr.bf16.mxu0 0
    %2302 = vmatpush1.bf16.msra.mxu0 0
    %2303 = vmatprep.subr.bf16.mxu0 0
    %2304 = vmatpush1.bf16.msra.mxu0 0
    %2305 = vmatprep.mubr.bf16.mxu0 %v1902
    %2306 = vmatmul.mubr.bf16.gmra.mrb[0].mxu0 %v76
    %v2307 = vpop.f32.mrb[0].mxu0
    %v2308 = vadd.f32 %v2267, %v2307
    %v2309 = vpop.f32.mrb[0].mxu0
    %v2310 = vadd.f32 %v2269, %v2309
    %v2311 = vpop.f32.mrb[0].mxu0
    %v2312 = vpop.f32.mrb[0].mxu0
    %2313 = vdwg.mxu0
    %v2314 = vmax.f32 %v2103, 0.0
    %v2315 = vmax.f32 %v2105, 0.0
    %v2316 = vmax.f32 %v2308, 0.0
    %v2317 = vmax.f32 %v2310, 0.0
    %v2318 = vld [vmem:[#allocation6] sm:$0xff]
    %v2319 = vld [vmem:[#allocation6 + $0x8] sm:$0xff]
    %v2320 = vpack.c.bf16 %v2314, %v2314
    %v2321 = vpack.c.bf16 %v2315, %v2315
    %v2322 = vpack.c.bf16 %v2316, %v2316
    %v2323 = vpack.c.bf16 %v2317, %v2317
    %v2324 = vld [vmem:[%s4] sm:$0xff]
    %2326 = vset.pattern.permute.xlu0 0
    %2327 = vperm.xlu0 %2326, %v2324
    %v2328 = vpop.permute.xlu0 %2327
    %v2332 = vunpack.c.l.b16 %v2318
    %v2333 = vunpack.c.h.b16 %v2318
    %v2334 = vunpack.c.l.b16 %v2319
    %v2335 = vunpack.c.h.b16 %v2319
    %v2336 = vpack.c.b16 %v2332, %v2332
    %v2337 = vpack.c.b16 %v2333, %v2333
    %v2338 = vpack.c.b16 %v2334, %v2334
    %v2339 = vpack.c.b16 %v2335, %v2335
    %2344 = vmatprep.subr.bf16.mxu0 %v2321
    %2345 = vmatpush1.bf16.xpose.msra.mxu0 %v2320
    %2346 = vmatprep.subr.bf16.mxu0 0
    %2347 = vmatpush1.bf16.xpose.msra.mxu0 0
    %2348 = vmatprep.subr.bf16.mxu0 0
    %2349 = vmatpush1.bf16.xpose.msra.mxu0 0
    %2350 = vmatprep.subr.bf16.mxu0 0
    %2351 = vmatpush1.bf16.xpose.msra.mxu0 0
    %2352 = vmatprep.subr.bf16.mxu0 0
    %2353 = vmatpush1.bf16.xpose.msra.mxu0 0
    %2354 = vmatprep.subr.bf16.mxu0 0
    %2355 = vmatpush1.bf16.xpose.msra.mxu0 0
    %2356 = vmatprep.subr.bf16.mxu0 0
    %2357 = vmatpush1.bf16.xpose.msra.mxu0 0
    %2358 = vmatprep.subr.bf16.mxu0 0
    %2359 = vmatpush1.bf16.xpose.msra.mxu0 0
    %2360 = vmatprep.subr.bf16.mxu0 0
    %2361 = vmatpush1.bf16.xpose.msra.mxu0 0
    %2362 = vmatprep.subr.bf16.mxu0 0
    %2363 = vmatpush1.bf16.xpose.msra.mxu0 0
    %2364 = vmatprep.subr.bf16.mxu0 0
    %2365 = vmatpush1.bf16.xpose.msra.mxu0 0
    %2366 = vmatprep.subr.bf16.mxu0 0
    %2367 = vmatpush1.bf16.xpose.msra.mxu0 0
    %2368 = vmatprep.subr.bf16.mxu0 0
    %2369 = vmatpush1.bf16.xpose.msra.mxu0 0
    %2370 = vmatprep.subr.bf16.mxu0 0
    %2371 = vmatpush1.bf16.xpose.msra.mxu0 0
    %2372 = vmatprep.subr.bf16.mxu0 0
    %2373 = vmatpush1.bf16.xpose.msra.mxu0 0
    %2374 = vmatprep.subr.bf16.mxu0 0
    %2375 = vmatpush1.bf16.xpose.msra.mxu0 0
    %2376 = vmatprep.mubr.bf16.mxu0 %v2337
    %2377 = vmatmul.mubr.bf16.gmra.mrb[0].mxu0 %v2336
    %v2378 = vpop.f32.mrb[0].mxu0
    %v2379 = vadd.f32 %v2328, %v2378
    %v2380 = vpop.f32.mrb[0].mxu0
    %v2381 = vpop.f32.mrb[0].mxu0
    %v2382 = vpop.f32.mrb[0].mxu0
    %2383 = vdwg.mxu0
    %2384 = vmatprep.subr.bf16.mxu0 %v2323
    %2385 = vmatpush1.bf16.xpose.msra.mxu0 %v2322
    %2386 = vmatprep.subr.bf16.mxu0 0
    %2387 = vmatpush1.bf16.xpose.msra.mxu0 0
    %2388 = vmatprep.subr.bf16.mxu0 0
    %2389 = vmatpush1.bf16.xpose.msra.mxu0 0
    %2390 = vmatprep.subr.bf16.mxu0 0
    %2391 = vmatpush1.bf16.xpose.msra.mxu0 0
    %2392 = vmatprep.subr.bf16.mxu0 0
    %2393 = vmatpush1.bf16.xpose.msra.mxu0 0
    %2394 = vmatprep.subr.bf16.mxu0 0
    %2395 = vmatpush1.bf16.xpose.msra.mxu0 0
    %2396 = vmatprep.subr.bf16.mxu0 0
    %2397 = vmatpush1.bf16.xpose.msra.mxu0 0
    %2398 = vmatprep.subr.bf16.mxu0 0
    %2399 = vmatpush1.bf16.xpose.msra.mxu0 0
    %2400 = vmatprep.subr.bf16.mxu0 0
    %2401 = vmatpush1.bf16.xpose.msra.mxu0 0
    %2402 = vmatprep.subr.bf16.mxu0 0
    %2403 = vmatpush1.bf16.xpose.msra.mxu0 0
    %2404 = vmatprep.subr.bf16.mxu0 0
    %2405 = vmatpush1.bf16.xpose.msra.mxu0 0
    %2406 = vmatprep.subr.bf16.mxu0 0
    %2407 = vmatpush1.bf16.xpose.msra.mxu0 0
    %2408 = vmatprep.subr.bf16.mxu0 0
    %2409 = vmatpush1.bf16.xpose.msra.mxu0 0
    %2410 = vmatprep.subr.bf16.mxu0 0
    %2411 = vmatpush1.bf16.xpose.msra.mxu0 0
    %2412 = vmatprep.subr.bf16.mxu0 0
    %2413 = vmatpush1.bf16.xpose.msra.mxu0 0
    %2414 = vmatprep.subr.bf16.mxu0 0
    %2415 = vmatpush1.bf16.xpose.msra.mxu0 0
    %2416 = vmatprep.mubr.bf16.mxu0 %v2339
    %2417 = vmatmul.mubr.bf16.gmra.mrb[0].mxu0 %v2338
    %v2418 = vpop.f32.mrb[0].mxu0
    %v2419 = vadd.f32 %v2379, %v2418
    %v2420 = vpop.f32.mrb[0].mxu0
    %v2421 = vpop.f32.mrb[0].mxu0
    %v2422 = vpop.f32.mrb[0].mxu0
    %2423 = vdwg.mxu0
    %vm2424 = vcmask 64512
    %2425 = vst.msk [vmem:[%s5] sm:$0xff] %vm2424, %v2419
    // Predicated region
    $region34: #{actor_forward.1} parent=1 // pred_check
      _
    $region35: #{actor_forward.1} parent=1 // pred_check_branch
      %2427 = sbr.rel (0) target = $region37
    $region36: #{actor_forward.1} parent=1 // pred_region
      _
    $region37: #{actor_forward.1} parent=1 // pred_fallthru
      _
    // Predicated region
    $region38: #{actor_forward.1} parent=1 // pred_check
      _
    $region39: #{actor_forward.1} parent=1 // pred_check_branch
      %2429 = sbr.rel (0) target = $region41
    $region40: #{actor_forward.1} parent=1 // pred_region
      _
    $region41: #{actor_forward.1} parent=1 // pred_fallthru
      _
    %2430 = vsyncpa [#allocation3], 1
    %2431 = vsyncpa [#allocation5], 1

</llo_original>
